<compile_context>
chip_gen: v7x
topology: tpu7x:2x2x1
jax: 0.10.0
libtpu: 0.0.40
codegen_flags: <defaults>
</compile_context>

<pallas_src>
import functools
import math

import jax
import jax.numpy as jnp
from jax.experimental import pallas as pl
from jax.experimental.pallas import tpu as pltpu


def _softmax_sublane(x):
    """Softmax over axis 0 (the d_k / sublane axis) of a (d_k, lanes) tile."""
    m = jnp.max(x, axis=0, keepdims=True)
    e = jnp.exp(x - m)
    s = jnp.sum(e, axis=0, keepdims=True)
    return e * pl.reciprocal(s, approx=True)


def _spatial_attention_kernel(x_ref, wqv_ref, bqv_ref, wc_ref, bc_ref, key_ref,
                              gw1_ref, gb_ref, out_ref, att_ref,
                              *, head, d_k, d_model, n_valid, apply_affine):
    x = x_ref[0]                                   # (d_model, N_pad), lane-dense
    n_pad = x.shape[-1]

    # Fused q/v 1x1 convs (single MXU matmul) + ReLU.  1/sqrt(d_k) is already
    # folded into the q-half of wqv/bqv in the wrapper.
    # TODO(synk): nn.Dropout has no inference-side effect; treated as identity.
    qv = jnp.maximum(
        jnp.dot(wqv_ref[...], x, preferred_element_type=jnp.float32)
        + bqv_ref[...], 0.0)
    q = qv[:d_model, :]
    v = qv[d_model:, :]

    # Zero the padded node columns of v (ReLU(bias) would otherwise leak into
    # the adaptive-adjacency term written to padded outputs; also keeps the kv
    # contraction clean regardless of key padding).
    if n_valid < n_pad:
        lane = jax.lax.broadcasted_iota(jnp.int32, (1, n_pad), 1)
        v = jnp.where(lane < n_valid, v, 0.0)

    # Per-head linear attention, channel-major (d_k, N_pad) throughout:
    # no transposes, no concatenate. `head` is small -> static unroll.
    for h in range(head):
        qh = q[h * d_k:(h + 1) * d_k, :]                       # (d_k, N_pad)
        vh = v[h * d_k:(h + 1) * d_k, :]                       # (d_k, N_pad)
        ks = key_ref[h]                  # precomputed softmax, padded cols = 0
        qs = _softmax_sublane(qh)                              # softmax over d_k
        # kv[x, y] = sum_n key[n, x] * v[n, y]   (contract node/lane axis)
        kv = jax.lax.dot_general(ks, vh, (((1,), (1,)), ((), ())),
                                 preferred_element_type=jnp.float32)   # (d_k, d_k)
        # out[y, n] = sum_x q[n, x] * kv[x, y]
        aqkv = jax.lax.dot_general(kv, qs, (((0,), (0,)), ((), ())),
                                   preferred_element_type=jnp.float32)  # (d_k, N_pad)
        # Adaptive-adjacency term reduces exactly to vh (see header comment).
        att_ref[pl.ds(h * d_k, d_k), :] = aqkv + vh

    # 'concat' 1x1 conv + ReLU (dropout identity).
    c = jnp.maximum(
        jnp.dot(wc_ref[...], att_ref[...], preferred_element_type=jnp.float32)
        + bc_ref[...], 0.0)

    if apply_affine:     # PyTorch skips this when num_nodes in [170, 358, 5]
        out_ref[0] = c * gw1_ref[...] + gb_ref[...]            # gw1 = weight + 1
    else:
        out_ref[0] = c


def spatial_attention_forward(x, params, *, head):
    """x: (B, d_model, num_nodes, 1) float32. Returns (out, weight, bias)."""
    B, d_model, N, L = x.shape
    assert L == 1, "kernel implemented for seq_length == 1 (module default)"
    d_k = d_model // head
    assert head * d_k == d_model
    apply_affine = N not in (170, 358, 5)
    inv_sqrt_dk = 1.0 / math.sqrt(d_k)

    n_pad = ((N + 127) // 128) * 128       # lane-dense node axis (>= 128)
    pad = n_pad - N

    x3 = jnp.pad(x.reshape(B, d_model, N), ((0, 0), (0, 0), (0, pad)))

    # Fold 1/sqrt(d_k) into the q branch (ReLU commutes with a positive scale),
    # then stack q/v 1x1 convs into one (2*d_model, d_model) weight.
    wqv = jnp.concatenate([params["wq"] * inv_sqrt_dk, params["wv"]], axis=0)
    bqv = jnp.concatenate([params["bq"] * inv_sqrt_dk,
                           params["bv"]]).reshape(2 * d_model, 1)
    wc = params["wc"]
    bc = params["bc"].reshape(d_model, 1)
    # Memory keys are input-independent: softmax once here, channel-major
    # (head, d_k, N_pad) with zero-padded node columns so padded lanes
    # contribute nothing to the kv contraction.
    key = jax.nn.softmax(params["memory"].reshape(head, N, d_k) * inv_sqrt_dk,
                         axis=-1)
    key = jnp.pad(key.transpose(0, 2, 1), ((0, 0), (0, 0), (0, pad)))
    gw1 = jnp.pad(params["weight"].reshape(d_model, N) + 1.0, ((0, 0), (0, pad)))
    gb = jnp.pad(params["bias"].reshape(d_model, N), ((0, 0), (0, pad)))

    def full_spec(arr):
        nd = arr.ndim
        return pl.BlockSpec(arr.shape, lambda b, _nd=nd: (0,) * _nd)

    out = pl.pallas_call(
        functools.partial(_spatial_attention_kernel, head=head, d_k=d_k,
                          d_model=d_model, n_valid=N, apply_affine=apply_affine),
        out_shape=jax.ShapeDtypeStruct((B, d_model, n_pad), jnp.float32),
        grid=(B,),
        in_specs=[
            pl.BlockSpec((1, d_model, n_pad), lambda b: (b, 0, 0)),
            full_spec(wqv), full_spec(bqv),
            full_spec(wc), full_spec(bc),
            full_spec(key), full_spec(gw1), full_spec(gb),
        ],
        out_specs=pl.BlockSpec((1, d_model, n_pad), lambda b: (b, 0, 0)),
        scratch_shapes=[pltpu.VMEM((d_model, n_pad), jnp.float32)],
        compiler_params=pltpu.CompilerParams(dimension_semantics=("parallel",)),
    )(x3, wqv, bqv, wc, bc, key, gw1, gb)

    out = out[:, :, :N].reshape(B, d_model, N, 1)
    return out, params["weight"], params["bias"]


def reference_forward(x, params, *, head):
    """Pure-JAX mirror of the PyTorch forward (eval mode), for validation.

    It still computes the adaptive-adjacency term explicitly, so it also
    validates the identity used to elide that term inside the kernel."""
    B, d_model, N, L = x.shape
    d_k = d_model // head

    def conv1x1(t, w, b):
        y = jnp.einsum("oc,bcnl->bonl", w, t) + b[None, :, None, None]
        return jnp.maximum(y, 0.0)

    q = conv1x1(x, params["wq"], params["bq"])
    v = conv1x1(x, params["wv"], params["bv"])
    q = q.reshape(B, head, d_k, N, L).transpose(0, 1, 4, 3, 2)      # (B,h,L,N,d_k)
    v = v.reshape(B, head, d_k, N, L).transpose(0, 1, 4, 3, 2)
    key = jax.nn.softmax(params["memory"] / math.sqrt(d_k), axis=-1)
    q = jax.nn.softmax(q / math.sqrt(d_k), axis=-1)
    aapt = jax.nn.softmax(
        jnp.maximum(params["nodevec1"] @ params["nodevec2"], 0.0), axis=-1)
    kv = jnp.einsum("hlnx,bhlny->bhlxy", key, v)
    attn_qkv = jnp.einsum("bhlnx,bhlxy->bhlny", q, kv)
    attn_dyn = jnp.einsum("nm,bhlnc->bhlnc", aapt, v)
    xo = attn_qkv + attn_dyn
    xo = xo.transpose(0, 1, 4, 3, 2).reshape(B, d_model, N, L)
    xo = conv1x1(xo, params["wc"], params["bc"])
    if N not in (170, 358, 5):
        xo = xo * params["weight"][None] + params["bias"][None] + xo
    return xo, params["weight"], params["bias"]


if __name__ == "__main__":
    # Small shapes consistent with the module: B=2, d_model=32, head=4 (d_k=8),
    # num_nodes=16, seq_length=1.
    B, d_model, head, N, L, apt = 2, 32, 4, 16, 1, 10
    d_k = d_model // head

    root = jax.random.PRNGKey(0)
    ks = jax.random.split(root, 12)
    cs = 1.0 / math.sqrt(d_model)                     # conv default init scale
    xb = math.sqrt(6.0 / (N + d_k))                   # xavier-ish bound for memory
    params = {
        "wq": jax.random.uniform(ks[0], (d_model, d_model), jnp.float32, -cs, cs),
        "bq": jax.random.uniform(ks[1], (d_model,), jnp.float32, -cs, cs),
        "wv": jax.random.uniform(ks[2], (d_model, d_model), jnp.float32, -cs, cs),
        "bv": jax.random.uniform(ks[3], (d_model,), jnp.float32, -cs, cs),
        "wc": jax.random.uniform(ks[4], (d_model, d_model), jnp.float32, -cs, cs),
        "bc": jax.random.uniform(ks[5], (d_model,), jnp.float32, -cs, cs),
        "memory": jax.random.uniform(ks[6], (head, L, N, d_k), jnp.float32, -xb, xb),
        "weight": jnp.ones((d_model, N, L), jnp.float32),
        "bias": jnp.zeros((d_model, N, L), jnp.float32),
        "nodevec1": jax.random.normal(ks[7], (N, apt), jnp.float32),
        "nodevec2": jax.random.normal(ks[8], (apt, N), jnp.float32),
    }
    x = jax.random.normal(ks[9], (B, d_model, N, L), jnp.float32)

    out, w, b = spatial_attention_forward(x, params, head=head)
    out = jax.block_until_ready(out)

    ref_out, _, _ = reference_forward(x, params, head=head)
    assert out.shape == (B, d_model, N, L)
    # Tolerance allows for the EUP approximate reciprocal in the q softmax and
    # the (exact-in-math, ~1e-7-in-fp) elision of the adaptive-adjacency term.
    assert jnp.allclose(out, ref_out, rtol=3e-3, atol=3e-3), (
        float(jnp.max(jnp.abs(out - ref_out))))
    print("KERNEL_OK")
</pallas_src>

<mosaic_0001>
module attributes {stable_mosaic.version = 11 : i64} {
  func.func @_spatial_attention_kernel(%arg0: i32, %arg1: memref<1x32x128xf32, #tpu.memory_space<vmem>>, %arg2: memref<64x32xf32, #tpu.memory_space<vmem>>, %arg3: memref<64x1xf32, #tpu.memory_space<vmem>>, %arg4: memref<32x32xf32, #tpu.memory_space<vmem>>, %arg5: memref<32x1xf32, #tpu.memory_space<vmem>>, %arg6: memref<4x8x128xf32, #tpu.memory_space<vmem>>, %arg7: memref<32x128xf32, #tpu.memory_space<vmem>>, %arg8: memref<32x128xf32, #tpu.memory_space<vmem>>, %arg9: memref<1x32x128xf32, #tpu.memory_space<vmem>>, %arg10: memref<32x128xf32, #tpu.memory_space<vmem>>) attributes {dimension_semantics = [#tpu.dimension_semantics<parallel>], iteration_bounds = array<i64: 2>, scalar_prefetch = 0 : i64, scratch_operands = 1 : i64, tpu.core_type = #tpu.core_type<tc>, window_params = [{transform_indices = @transform_0, window_bounds = array<i64: 1, 32, 128>}, {pipeline_mode = #tpu.pipeline_mode<synchronous>, transform_indices = @transform_1, window_bounds = array<i64: 64, 32>}, {pipeline_mode = #tpu.pipeline_mode<synchronous>, transform_indices = @transform_2, window_bounds = array<i64: 64, 1>}, {pipeline_mode = #tpu.pipeline_mode<synchronous>, transform_indices = @transform_3, window_bounds = array<i64: 32, 32>}, {pipeline_mode = #tpu.pipeline_mode<synchronous>, transform_indices = @transform_4, window_bounds = array<i64: 32, 1>}, {pipeline_mode = #tpu.pipeline_mode<synchronous>, transform_indices = @transform_5, window_bounds = array<i64: 4, 8, 128>}, {pipeline_mode = #tpu.pipeline_mode<synchronous>, transform_indices = @transform_6, window_bounds = array<i64: 32, 128>}, {pipeline_mode = #tpu.pipeline_mode<synchronous>, transform_indices = @transform_7, window_bounds = array<i64: 32, 128>}, {transform_indices = @transform_8, window_bounds = array<i64: 1, 32, 128>}]} {
    %c0 = arith.constant 0 : index
    %c0_0 = arith.constant 0 : index
    %c0_1 = arith.constant 0 : index
    %0 = vector.load %arg1[%c0, %c0_0, %c0_1] : memref<1x32x128xf32, #tpu.memory_space<vmem>>, vector<1x32x128xf32>
    %1 = vector.shape_cast %0 : vector<1x32x128xf32> to vector<32x128xf32>
    %c0_2 = arith.constant 0 : index
    %c0_3 = arith.constant 0 : index
    %2 = vector.load %arg2[%c0_2, %c0_3] : memref<64x32xf32, #tpu.memory_space<vmem>>, vector<64x32xf32>
    %cst = arith.constant dense<0.000000e+00> : vector<64x128xf32>
    %3 = tpu.matmul %2, %1, %cst {dimension_numbers = #tpu.dot_dimension_numbers<[1], [0], [0], [1], [0, 0, 1, 1], [], []>} : vector<64x32xf32>, vector<32x128xf32>, vector<64x128xf32> -> vector<64x128xf32>
    %c0_4 = arith.constant 0 : index
    %c0_5 = arith.constant 0 : index
    %4 = vector.load %arg3[%c0_4, %c0_5] : memref<64x1xf32, #tpu.memory_space<vmem>>, vector<64x1xf32>
    %5 = vector.broadcast %4 : vector<64x1xf32> to vector<64x128xf32>
    %6 = arith.addf %3, %5 : vector<64x128xf32>
    %cst_6 = arith.constant 0.000000e+00 : f32
    %7 = vector.broadcast %cst_6 : f32 to vector<64x128xf32>
    %8 = arith.maximumf %6, %7 : vector<64x128xf32>
    %9 = vector.extract_strided_slice %8 {offsets = [0, 0], sizes = [32, 128], strides = [1, 1]} : vector<64x128xf32> to vector<32x128xf32>
    %10 = vector.extract_strided_slice %8 {offsets = [32, 0], sizes = [32, 128], strides = [1, 1]} : vector<64x128xf32> to vector<32x128xf32>
    %11 = tpu.iota {dimensions = array<i32: 1>} : vector<1x128xi32>
    %c16_i32 = arith.constant 16 : i32
    %12 = vector.broadcast %c16_i32 : i32 to vector<1x128xi32>
    %13 = arith.cmpi slt, %11, %12 : vector<1x128xi32>
    %cst_7 = arith.constant 0.000000e+00 : f32
    %14 = vector.shape_cast %13 : vector<1x128xi1> to vector<1x128xi1>
    %15 = vector.broadcast %14 : vector<1x128xi1> to vector<32x128xi1>
    %16 = vector.broadcast %cst_7 : f32 to vector<32x128xf32>
    %17 = arith.select %15, %10, %16 : vector<32x128xi1>, vector<32x128xf32>
    %18 = vector.extract_strided_slice %9 {offsets = [0, 0], sizes = [8, 128], strides = [1, 1]} : vector<32x128xf32> to vector<8x128xf32>
    %19 = vector.extract_strided_slice %17 {offsets = [0, 0], sizes = [8, 128], strides = [1, 1]} : vector<32x128xf32> to vector<8x128xf32>
    %c0_8 = arith.constant 0 : index
    %c0_9 = arith.constant 0 : index
    %c0_10 = arith.constant 0 : index
    %20 = vector.load %arg6[%c0_8, %c0_9, %c0_10] : memref<4x8x128xf32, #tpu.memory_space<vmem>>, vector<1x8x128xf32>
    %21 = vector.shape_cast %20 : vector<1x8x128xf32> to vector<8x128xf32>
    %cst_11 = arith.constant dense<0xFF800000> : vector<128xf32>
    %22 = vector.multi_reduction <maximumf>, %18, %cst_11 [0] : vector<8x128xf32> to vector<128xf32>
    %23 = vector.shape_cast %22 : vector<128xf32> to vector<1x128xf32>
    %24 = vector.broadcast %23 : vector<1x128xf32> to vector<8x128xf32>
    %25 = arith.subf %18, %24 : vector<8x128xf32>
    %26 = math.exp %25 : vector<8x128xf32>
    %cst_12 = arith.constant dense<0.000000e+00> : vector<128xf32>
    %27 = vector.multi_reduction <add>, %26, %cst_12 [0] : vector<8x128xf32> to vector<128xf32>
    %28 = vector.shape_cast %27 : vector<128xf32> to vector<1x128xf32>
    %29 = tpu.reciprocal %28 {approx = true} : vector<1x128xf32> -> vector<1x128xf32>
    %30 = vector.broadcast %29 : vector<1x128xf32> to vector<8x128xf32>
    %31 = arith.mulf %26, %30 : vector<8x128xf32>
    %cst_13 = arith.constant dense<0.000000e+00> : vector<8x8xf32>
    %32 = tpu.matmul %21, %19, %cst_13 {dimension_numbers = #tpu.dot_dimension_numbers<[1], [1], [0], [0], [0, 0, 1, 0], [], []>} : vector<8x128xf32>, vector<8x128xf32>, vector<8x8xf32> -> vector<8x8xf32>
    %cst_14 = arith.constant dense<0.000000e+00> : vector<8x128xf32>
    %33 = tpu.matmul %32, %31, %cst_14 {dimension_numbers = #tpu.dot_dimension_numbers<[0], [0], [1], [1], [0, 1, 1, 1], [], []>} : vector<8x8xf32>, vector<8x128xf32>, vector<8x128xf32> -> vector<8x128xf32>
    %34 = arith.addf %33, %19 : vector<8x128xf32>
    %c0_15 = arith.constant 0 : index
    %c0_16 = arith.constant 0 : index
    %35 = vector.load %arg10[%c0_15, %c0_16] : memref<32x128xf32, #tpu.memory_space<vmem>>, vector<8x128xf32>
    tpu.vector_store %arg10[%c0_15, %c0_16], %34 {strides = array<i32>} : memref<32x128xf32, #tpu.memory_space<vmem>>, vector<8x128xf32>,
    %36 = vector.extract_strided_slice %9 {offsets = [8, 0], sizes = [8, 128], strides = [1, 1]} : vector<32x128xf32> to vector<8x128xf32>
    %37 = vector.extract_strided_slice %17 {offsets = [8, 0], sizes = [8, 128], strides = [1, 1]} : vector<32x128xf32> to vector<8x128xf32>
    %c1 = arith.constant 1 : index
    %c0_17 = arith.constant 0 : index
    %c0_18 = arith.constant 0 : index
    %38 = vector.load %arg6[%c1, %c0_17, %c0_18] : memref<4x8x128xf32, #tpu.memory_space<vmem>>, vector<1x8x128xf32>
    %39 = vector.shape_cast %38 : vector<1x8x128xf32> to vector<8x128xf32>
    %cst_19 = arith.constant dense<0xFF800000> : vector<128xf32>
    %40 = vector.multi_reduction <maximumf>, %36, %cst_19 [0] : vector<8x128xf32> to vector<128xf32>
    %41 = vector.shape_cast %40 : vector<128xf32> to vector<1x128xf32>
    %42 = vector.broadcast %41 : vector<1x128xf32> to vector<8x128xf32>
    %43 = arith.subf %36, %42 : vector<8x128xf32>
    %44 = math.exp %43 : vector<8x128xf32>
    %cst_20 = arith.constant dense<0.000000e+00> : vector<128xf32>
    %45 = vector.multi_reduction <add>, %44, %cst_20 [0] : vector<8x128xf32> to vector<128xf32>
    %46 = vector.shape_cast %45 : vector<128xf32> to vector<1x128xf32>
    %47 = tpu.reciprocal %46 {approx = true} : vector<1x128xf32> -> vector<1x128xf32>
    %48 = vector.broadcast %47 : vector<1x128xf32> to vector<8x128xf32>
    %49 = arith.mulf %44, %48 : vector<8x128xf32>
    %cst_21 = arith.constant dense<0.000000e+00> : vector<8x8xf32>
    %50 = tpu.matmul %39, %37, %cst_21 {dimension_numbers = #tpu.dot_dimension_numbers<[1], [1], [0], [0], [0, 0, 1, 0], [], []>} : vector<8x128xf32>, vector<8x128xf32>, vector<8x8xf32> -> vector<8x8xf32>
    %cst_22 = arith.constant dense<0.000000e+00> : vector<8x128xf32>
    %51 = tpu.matmul %50, %49, %cst_22 {dimension_numbers = #tpu.dot_dimension_numbers<[0], [0], [1], [1], [0, 1, 1, 1], [], []>} : vector<8x8xf32>, vector<8x128xf32>, vector<8x128xf32> -> vector<8x128xf32>
    %52 = arith.addf %51, %37 : vector<8x128xf32>
    %c8 = arith.constant 8 : index
    %c0_23 = arith.constant 0 : index
    %53 = vector.load %arg10[%c8, %c0_23] : memref<32x128xf32, #tpu.memory_space<vmem>>, vector<8x128xf32>
    tpu.vector_store %arg10[%c8, %c0_23], %52 {strides = array<i32>} : memref<32x128xf32, #tpu.memory_space<vmem>>, vector<8x128xf32>,
    %54 = vector.extract_strided_slice %9 {offsets = [16, 0], sizes = [8, 128], strides = [1, 1]} : vector<32x128xf32> to vector<8x128xf32>
    %55 = vector.extract_strided_slice %17 {offsets = [16, 0], sizes = [8, 128], strides = [1, 1]} : vector<32x128xf32> to vector<8x128xf32>
    %c2 = arith.constant 2 : index
    %c0_24 = arith.constant 0 : index
    %c0_25 = arith.constant 0 : index
    %56 = vector.load %arg6[%c2, %c0_24, %c0_25] : memref<4x8x128xf32, #tpu.memory_space<vmem>>, vector<1x8x128xf32>
    %57 = vector.shape_cast %56 : vector<1x8x128xf32> to vector<8x128xf32>
    %cst_26 = arith.constant dense<0xFF800000> : vector<128xf32>
    %58 = vector.multi_reduction <maximumf>, %54, %cst_26 [0] : vector<8x128xf32> to vector<128xf32>
    %59 = vector.shape_cast %58 : vector<128xf32> to vector<1x128xf32>
    %60 = vector.broadcast %59 : vector<1x128xf32> to vector<8x128xf32>
    %61 = arith.subf %54, %60 : vector<8x128xf32>
    %62 = math.exp %61 : vector<8x128xf32>
    %cst_27 = arith.constant dense<0.000000e+00> : vector<128xf32>
    %63 = vector.multi_reduction <add>, %62, %cst_27 [0] : vector<8x128xf32> to vector<128xf32>
    %64 = vector.shape_cast %63 : vector<128xf32> to vector<1x128xf32>
    %65 = tpu.reciprocal %64 {approx = true} : vector<1x128xf32> -> vector<1x128xf32>
    %66 = vector.broadcast %65 : vector<1x128xf32> to vector<8x128xf32>
    %67 = arith.mulf %62, %66 : vector<8x128xf32>
    %cst_28 = arith.constant dense<0.000000e+00> : vector<8x8xf32>
    %68 = tpu.matmul %57, %55, %cst_28 {dimension_numbers = #tpu.dot_dimension_numbers<[1], [1], [0], [0], [0, 0, 1, 0], [], []>} : vector<8x128xf32>, vector<8x128xf32>, vector<8x8xf32> -> vector<8x8xf32>
    %cst_29 = arith.constant dense<0.000000e+00> : vector<8x128xf32>
    %69 = tpu.matmul %68, %67, %cst_29 {dimension_numbers = #tpu.dot_dimension_numbers<[0], [0], [1], [1], [0, 1, 1, 1], [], []>} : vector<8x8xf32>, vector<8x128xf32>, vector<8x128xf32> -> vector<8x128xf32>
    %70 = arith.addf %69, %55 : vector<8x128xf32>
    %c16 = arith.constant 16 : index
    %c0_30 = arith.constant 0 : index
    %71 = vector.load %arg10[%c16, %c0_30] : memref<32x128xf32, #tpu.memory_space<vmem>>, vector<8x128xf32>
    tpu.vector_store %arg10[%c16, %c0_30], %70 {strides = array<i32>} : memref<32x128xf32, #tpu.memory_space<vmem>>, vector<8x128xf32>,
    %72 = vector.extract_strided_slice %9 {offsets = [24, 0], sizes = [8, 128], strides = [1, 1]} : vector<32x128xf32> to vector<8x128xf32>
    %73 = vector.extract_strided_slice %17 {offsets = [24, 0], sizes = [8, 128], strides = [1, 1]} : vector<32x128xf32> to vector<8x128xf32>
    %c3 = arith.constant 3 : index
    %c0_31 = arith.constant 0 : index
    %c0_32 = arith.constant 0 : index
    %74 = vector.load %arg6[%c3, %c0_31, %c0_32] : memref<4x8x128xf32, #tpu.memory_space<vmem>>, vector<1x8x128xf32>
    %75 = vector.shape_cast %74 : vector<1x8x128xf32> to vector<8x128xf32>
    %cst_33 = arith.constant dense<0xFF800000> : vector<128xf32>
    %76 = vector.multi_reduction <maximumf>, %72, %cst_33 [0] : vector<8x128xf32> to vector<128xf32>
    %77 = vector.shape_cast %76 : vector<128xf32> to vector<1x128xf32>
    %78 = vector.broadcast %77 : vector<1x128xf32> to vector<8x128xf32>
    %79 = arith.subf %72, %78 : vector<8x128xf32>
    %80 = math.exp %79 : vector<8x128xf32>
    %cst_34 = arith.constant dense<0.000000e+00> : vector<128xf32>
    %81 = vector.multi_reduction <add>, %80, %cst_34 [0] : vector<8x128xf32> to vector<128xf32>
    %82 = vector.shape_cast %81 : vector<128xf32> to vector<1x128xf32>
    %83 = tpu.reciprocal %82 {approx = true} : vector<1x128xf32> -> vector<1x128xf32>
    %84 = vector.broadcast %83 : vector<1x128xf32> to vector<8x128xf32>
    %85 = arith.mulf %80, %84 : vector<8x128xf32>
    %cst_35 = arith.constant dense<0.000000e+00> : vector<8x8xf32>
    %86 = tpu.matmul %75, %73, %cst_35 {dimension_numbers = #tpu.dot_dimension_numbers<[1], [1], [0], [0], [0, 0, 1, 0], [], []>} : vector<8x128xf32>, vector<8x128xf32>, vector<8x8xf32> -> vector<8x8xf32>
    %cst_36 = arith.constant dense<0.000000e+00> : vector<8x128xf32>
    %87 = tpu.matmul %86, %85, %cst_36 {dimension_numbers = #tpu.dot_dimension_numbers<[0], [0], [1], [1], [0, 1, 1, 1], [], []>} : vector<8x8xf32>, vector<8x128xf32>, vector<8x128xf32> -> vector<8x128xf32>
    %88 = arith.addf %87, %73 : vector<8x128xf32>
    %c24 = arith.constant 24 : index
    %c0_37 = arith.constant 0 : index
    %89 = vector.load %arg10[%c24, %c0_37] : memref<32x128xf32, #tpu.memory_space<vmem>>, vector<8x128xf32>
    tpu.vector_store %arg10[%c24, %c0_37], %88 {strides = array<i32>} : memref<32x128xf32, #tpu.memory_space<vmem>>, vector<8x128xf32>,
    %c0_38 = arith.constant 0 : index
    %c0_39 = arith.constant 0 : index
    %90 = vector.load %arg4[%c0_38, %c0_39] : memref<32x32xf32, #tpu.memory_space<vmem>>, vector<32x32xf32>
    %c0_40 = arith.constant 0 : index
    %c0_41 = arith.constant 0 : index
    %91 = vector.load %arg10[%c0_40, %c0_41] : memref<32x128xf32, #tpu.memory_space<vmem>>, vector<32x128xf32>
    %cst_42 = arith.constant dense<0.000000e+00> : vector<32x128xf32>
    %92 = tpu.matmul %90, %91, %cst_42 {dimension_numbers = #tpu.dot_dimension_numbers<[1], [0], [0], [1], [0, 0, 1, 1], [], []>} : vector<32x32xf32>, vector<32x128xf32>, vector<32x128xf32> -> vector<32x128xf32>
    %c0_43 = arith.constant 0 : index
    %c0_44 = arith.constant 0 : index
    %93 = vector.load %arg5[%c0_43, %c0_44] : memref<32x1xf32, #tpu.memory_space<vmem>>, vector<32x1xf32>
    %94 = vector.broadcast %93 : vector<32x1xf32> to vector<32x128xf32>
    %95 = arith.addf %92, %94 : vector<32x128xf32>
    %cst_45 = arith.constant 0.000000e+00 : f32
    %96 = vector.broadcast %cst_45 : f32 to vector<32x128xf32>
    %97 = arith.maximumf %95, %96 : vector<32x128xf32>
    %c0_46 = arith.constant 0 : index
    %c0_47 = arith.constant 0 : index
    %98 = vector.load %arg7[%c0_46, %c0_47] : memref<32x128xf32, #tpu.memory_space<vmem>>, vector<32x128xf32>
    %99 = arith.mulf %97, %98 : vector<32x128xf32>
    %c0_48 = arith.constant 0 : index
    %c0_49 = arith.constant 0 : index
    %100 = vector.load %arg8[%c0_48, %c0_49] : memref<32x128xf32, #tpu.memory_space<vmem>>, vector<32x128xf32>
    %101 = arith.addf %99, %100 : vector<32x128xf32>
    %c0_50 = arith.constant 0 : index
    %c0_51 = arith.constant 0 : index
    %c0_52 = arith.constant 0 : index
    %102 = vector.load %arg9[%c0_50, %c0_51, %c0_52] : memref<1x32x128xf32, #tpu.memory_space<vmem>>, vector<1x32x128xf32>
    %103 = vector.shape_cast %102 : vector<1x32x128xf32> to vector<32x128xf32>
    %104 = vector.shape_cast %101 : vector<32x128xf32> to vector<1x32x128xf32>
    tpu.vector_store %arg9[%c0_50, %c0_51, %c0_52], %104 {strides = array<i32>} : memref<1x32x128xf32, #tpu.memory_space<vmem>>, vector<1x32x128xf32>,
    return
  }
  func.func @transform_0(%arg0: i32) -> (i32, i32, i32) {
    %c0_i32 = arith.constant 0 : i32
    %c0_i32_0 = arith.constant 0 : i32
    %c0_i32_1 = arith.constant 0 : i32
    return %arg0, %c0_i32, %c0_i32_0 : i32, i32, i32
  }
  func.func @transform_1(%arg0: i32) -> (i32, i32) {
    %c0_i32 = arith.constant 0 : i32
    %c0_i32_0 = arith.constant 0 : i32
    %c0_i32_1 = arith.constant 0 : i32
    return %c0_i32, %c0_i32_0 : i32, i32
  }
  func.func @transform_2(%arg0: i32) -> (i32, i32) {
    %c0_i32 = arith.constant 0 : i32
    %c0_i32_0 = arith.constant 0 : i32
    %c0_i32_1 = arith.constant 0 : i32
    return %c0_i32, %c0_i32_0 : i32, i32
  }
  func.func @transform_3(%arg0: i32) -> (i32, i32) {
    %c0_i32 = arith.constant 0 : i32
    %c0_i32_0 = arith.constant 0 : i32
    %c0_i32_1 = arith.constant 0 : i32
    return %c0_i32, %c0_i32_0 : i32, i32
  }
  func.func @transform_4(%arg0: i32) -> (i32, i32) {
    %c0_i32 = arith.constant 0 : i32
    %c0_i32_0 = arith.constant 0 : i32
    %c0_i32_1 = arith.constant 0 : i32
    return %c0_i32, %c0_i32_0 : i32, i32
  }
  func.func @transform_5(%arg0: i32) -> (i32, i32, i32) {
    %c0_i32 = arith.constant 0 : i32
    %c0_i32_0 = arith.constant 0 : i32
    %c0_i32_1 = arith.constant 0 : i32
    %c0_i32_2 = arith.constant 0 : i32
    return %c0_i32, %c0_i32_0, %c0_i32_1 : i32, i32, i32
  }
  func.func @transform_6(%arg0: i32) -> (i32, i32) {
    %c0_i32 = arith.constant 0 : i32
    %c0_i32_0 = arith.constant 0 : i32
    %c0_i32_1 = arith.constant 0 : i32
    return %c0_i32, %c0_i32_0 : i32, i32
  }
  func.func @transform_7(%arg0: i32) -> (i32, i32) {
    %c0_i32 = arith.constant 0 : i32
    %c0_i32_0 = arith.constant 0 : i32
    %c0_i32_1 = arith.constant 0 : i32
    return %c0_i32, %c0_i32_0 : i32, i32
  }
  func.func @transform_8(%arg0: i32) -> (i32, i32, i32) {
    %c0_i32 = arith.constant 0 : i32
    %c0_i32_0 = arith.constant 0 : i32
    %c0_i32_1 = arith.constant 0 : i32
    return %arg0, %c0_i32, %c0_i32_0 : i32, i32, i32
  }
}

</mosaic_0001>

<llo_original>
// kernel: tpu_custom_call.1
$region0: #{tpu_custom_call.1}
  #allocation0 [shape = 'u32[]', space=smem, size = 0x4, offset = 0x4, fixed_abs, tag = 'smem constant byte address 0x4 - core index']
  #allocation1 [shape = 'u32[144,128]{1,0:T(1,128)}', space=vmem, size = 0x12000, scoped, tag = 'internal scratch']
  #allocation2 [shape = 'f32[32,128]{1,0:T(8,128)}', space=vmem, size = 0x4000, scoped, tag = 'scratch operand']
  %s0 = inlined_call_operand.vmem [shape: f32[2,32,128], index: 0, kind: input, shape index: {}]
  %s1 = inlined_call_operand.vmem [shape: f32[64,32], index: 1, kind: input, shape index: {}]
  %s2 = inlined_call_operand.vmem [shape: f32[64,1], index: 2, kind: input, shape index: {}]
  %s3 = inlined_call_operand.vmem [shape: f32[32,32], index: 3, kind: input, shape index: {}]
  %s4 = inlined_call_operand.vmem [shape: f32[32,1], index: 4, kind: input, shape index: {}]
  %s5 = inlined_call_operand.vmem [shape: f32[4,8,128], index: 5, kind: input, shape index: {}]
  %s6 = inlined_call_operand.vmem [shape: f32[32,128], index: 6, kind: input, shape index: {}]
  %s7 = inlined_call_operand.hbm [shape: f32[32,128], index: 7, kind: input, shape index: {}]
  %s8 = inlined_call_operand.hbm [shape: f32[2,32,128], index: 8, kind: output, shape index: {}]
  %s9 = sld [smem:[#allocation0]]
  $region69: #{tpu_custom_call.1} parent=0
    _
  %s11 = ssub.s32 1, %s9
  %s12 = scalar_select 0, %s11, %s9
  $region1: #{tpu_custom_call.1} parent=0
    #allocation3 [shape = 'u8[16384]{0}', space=vmem, size = 0x4000, scoped, tag = 'input window, operand 7, single buffered']
    #allocation4 [shape = 's32[2]{0}', space=sflag, size = 0x8, scoped, tag = 'scoped memory for tpu_custom_call.1']
    #allocation5 [shape = 's32[2]{0}', space=sflag, size = 0x8, scoped, tag = 'scoped memory for tpu_custom_call.1']
    #allocation6 [shape = 'u8[32768]{0}', space=vmem, size = 0x8000, scoped, tag = 'output window, operand 0']
    %13 = vsyncpa [#allocation4], 0
    %14 = vsyncpa [#allocation5], 0
    %s15 = scalar_lea.sflag [#allocation5], 1
    %16 = vsyncpa %s15, 0
    loop: start=0, step=1, limit=4
    $region2: #{tpu_custom_call.1} parent=1 // loop_pre_header
      _
    $region3: #{tpu_custom_call.1} parent=1 // loop_header
      %s18 = sphi 0, %s22
      %p19 = scmp.ge.s32.totalorder %s18, 4
      %s28 = sphi 0, %s30
      %s31 = sphi 0, %s28
      %s32 = sphi 0, %s31
      %s48 = sphi 0, %s32
      %s52 = sphi 0, %s52
      %s54 = sphi 0, %s52
      %s55 = sphi 0, %s54
      %s69 = sphi 0, %s55
      %s73 = sphi 0, %s73
      %s75 = sphi 0, %s73
      %s76 = sphi 0, %s75
      %s90 = sphi 0, %s76
      %s94 = sphi 0, %s94
      %s96 = sphi 0, %s94
      %s97 = sphi 0, %s96
      %s111 = sphi 0, %s97
      %s115 = sphi 0, %s115
      %s117 = sphi 0, %s115
      %s118 = sphi 0, %s117
      %s132 = sphi 0, %s118
      %s136 = sphi 0, %s136
      %s138 = sphi 0, %s136
      %s139 = sphi 0, %s138
      %s153 = sphi 0, %s139
      %s157 = sphi 0, %s157
      %s159 = sphi 0, %s157
      %s160 = sphi 0, %s159
      %s174 = sphi 0, %s160
      %s178 = sphi 0, %s178
      %s180 = sphi 0, %s178
      %s181 = sphi 0, %s180
      %s195 = sphi 0, %s181
      %s201 = sphi 0, %s203
      %s204 = sphi 0, %s201
      %s205 = sphi 0, %s204
      %s221 = sphi 0, %s205
    $region4: #{tpu_custom_call.1} parent=1 // loop_header_branch
      %21 = sbr.rel (%p19) target = $region8
    $region5: #{tpu_custom_call.1} parent=1 // loop_body
      %s23 = ssub.s32 %s18, 1
      %s24 = ssub.s32 %s18, 2
      %s25 = sadd.s32 %s18, 1
      %s26 = ssub.s32 %s18, %s25
      %p27 = scmp.eq.s32.totalorder %s26, 0
      %s29 = sadd.s32 %s28, 1
      %s30 = scalar_select %p27, %s28, %s29
      %p33 = pneg %p27
      %p34 = scmp.eq.s32.totalorder %s18, 1
      %p35 = por %p33, %p34
      %p36 = scmp.ne.s32.totalorder %s28, %s31
      %p37 = scmp.eq.s32.totalorder %s18, 0
      %p38 = por %p36, %p37
      %p39 = scmp.ne.s32.totalorder %s28, %s31
      %p40 = scmp.eq.s32.totalorder %s23, 1
      %p41 = por %p39, %p40
      %p42 = scmp.ne.s32.totalorder %s31, %s32
      %p43 = scmp.eq.s32.totalorder %s23, 0
      %p44 = por %p42, %p43
      %p45 = scmp.ne.s32.totalorder %s31, %s32
      %p46 = scmp.eq.s32.totalorder %s24, 1
      %p47 = por %p45, %p46
      %p49 = scmp.ne.s32.totalorder %s32, %s48
      %p50 = scmp.eq.s32.totalorder %s24, 0
      %p51 = por %p49, %p50
      %s53 = sadd.s32 %s52, 1
      %p56 = scmp.eq.s32.totalorder %s18, 1
      %p57 = scmp.ne.s32.totalorder %s52, %s54
      %p58 = scmp.eq.s32.totalorder %s18, 0
      %p59 = por %p57, %p58
      %p60 = scmp.ne.s32.totalorder %s52, %s54
      %p61 = scmp.eq.s32.totalorder %s23, 1
      %p62 = por %p60, %p61
      %p63 = scmp.ne.s32.totalorder %s54, %s55
      %p64 = scmp.eq.s32.totalorder %s23, 0
      %p65 = por %p63, %p64
      %p66 = scmp.ne.s32.totalorder %s54, %s55
      %p67 = scmp.eq.s32.totalorder %s24, 1
      %p68 = por %p66, %p67
      %p70 = scmp.ne.s32.totalorder %s55, %s69
      %p71 = scmp.eq.s32.totalorder %s24, 0
      %p72 = por %p70, %p71
      %s74 = sadd.s32 %s73, 1
      %p77 = scmp.eq.s32.totalorder %s18, 1
      %p78 = scmp.ne.s32.totalorder %s73, %s75
      %p79 = scmp.eq.s32.totalorder %s18, 0
      %p80 = por %p78, %p79
      %p81 = scmp.ne.s32.totalorder %s73, %s75
      %p82 = scmp.eq.s32.totalorder %s23, 1
      %p83 = por %p81, %p82
      %p84 = scmp.ne.s32.totalorder %s75, %s76
      %p85 = scmp.eq.s32.totalorder %s23, 0
      %p86 = por %p84, %p85
      %p87 = scmp.ne.s32.totalorder %s75, %s76
      %p88 = scmp.eq.s32.totalorder %s24, 1
      %p89 = por %p87, %p88
      %p91 = scmp.ne.s32.totalorder %s76, %s90
      %p92 = scmp.eq.s32.totalorder %s24, 0
      %p93 = por %p91, %p92
      %s95 = sadd.s32 %s94, 1
      %p98 = scmp.eq.s32.totalorder %s18, 1
      %p99 = scmp.ne.s32.totalorder %s94, %s96
      %p100 = scmp.eq.s32.totalorder %s18, 0
      %p101 = por %p99, %p100
      %p102 = scmp.ne.s32.totalorder %s94, %s96
      %p103 = scmp.eq.s32.totalorder %s23, 1
      %p104 = por %p102, %p103
      %p105 = scmp.ne.s32.totalorder %s96, %s97
      %p106 = scmp.eq.s32.totalorder %s23, 0
      %p107 = por %p105, %p106
      %p108 = scmp.ne.s32.totalorder %s96, %s97
      %p109 = scmp.eq.s32.totalorder %s24, 1
      %p110 = por %p108, %p109
      %p112 = scmp.ne.s32.totalorder %s97, %s111
      %p113 = scmp.eq.s32.totalorder %s24, 0
      %p114 = por %p112, %p113
      %s116 = sadd.s32 %s115, 1
      %p119 = scmp.eq.s32.totalorder %s18, 1
      %p120 = scmp.ne.s32.totalorder %s115, %s117
      %p121 = scmp.eq.s32.totalorder %s18, 0
      %p122 = por %p120, %p121
      %p123 = scmp.ne.s32.totalorder %s115, %s117
      %p124 = scmp.eq.s32.totalorder %s23, 1
      %p125 = por %p123, %p124
      %p126 = scmp.ne.s32.totalorder %s117, %s118
      %p127 = scmp.eq.s32.totalorder %s23, 0
      %p128 = por %p126, %p127
      %p129 = scmp.ne.s32.totalorder %s117, %s118
      %p130 = scmp.eq.s32.totalorder %s24, 1
      %p131 = por %p129, %p130
      %p133 = scmp.ne.s32.totalorder %s118, %s132
      %p134 = scmp.eq.s32.totalorder %s24, 0
      %p135 = por %p133, %p134
      %s137 = sadd.s32 %s136, 1
      %p140 = scmp.eq.s32.totalorder %s18, 1
      %p141 = scmp.ne.s32.totalorder %s136, %s138
      %p142 = scmp.eq.s32.totalorder %s18, 0
      %p143 = por %p141, %p142
      %p144 = scmp.ne.s32.totalorder %s136, %s138
      %p145 = scmp.eq.s32.totalorder %s23, 1
      %p146 = por %p144, %p145
      %p147 = scmp.ne.s32.totalorder %s138, %s139
      %p148 = scmp.eq.s32.totalorder %s23, 0
      %p149 = por %p147, %p148
      %p150 = scmp.ne.s32.totalorder %s138, %s139
      %p151 = scmp.eq.s32.totalorder %s24, 1
      %p152 = por %p150, %p151
      %p154 = scmp.ne.s32.totalorder %s139, %s153
      %p155 = scmp.eq.s32.totalorder %s24, 0
      %p156 = por %p154, %p155
      %s158 = sadd.s32 %s157, 1
      %p161 = scmp.eq.s32.totalorder %s18, 1
      %p162 = scmp.ne.s32.totalorder %s157, %s159
      %p163 = scmp.eq.s32.totalorder %s18, 0
      %p164 = por %p162, %p163
      %p165 = scmp.ne.s32.totalorder %s157, %s159
      %p166 = scmp.eq.s32.totalorder %s23, 1
      %p167 = por %p165, %p166
      %p168 = scmp.ne.s32.totalorder %s159, %s160
      %p169 = scmp.eq.s32.totalorder %s23, 0
      %p170 = por %p168, %p169
      %p171 = scmp.ne.s32.totalorder %s159, %s160
      %p172 = scmp.eq.s32.totalorder %s24, 1
      %p173 = por %p171, %p172
      %p175 = scmp.ne.s32.totalorder %s160, %s174
      %p176 = scmp.eq.s32.totalorder %s24, 0
      %p177 = por %p175, %p176
      %s179 = sadd.s32 %s178, 1
      %p182 = scmp.eq.s32.totalorder %s18, 1
      %p183 = scmp.ne.s32.totalorder %s178, %s180
      %p184 = scmp.eq.s32.totalorder %s18, 0
      %p185 = por %p183, %p184
      %p186 = scmp.ne.s32.totalorder %s178, %s180
      %p187 = scmp.eq.s32.totalorder %s23, 1
      %p188 = por %p186, %p187
      %p189 = scmp.ne.s32.totalorder %s180, %s181
      %p190 = scmp.eq.s32.totalorder %s23, 0
      %p191 = por %p189, %p190
      %p192 = scmp.ne.s32.totalorder %s180, %s181
      %p193 = scmp.eq.s32.totalorder %s24, 1
      %p194 = por %p192, %p193
      %p196 = scmp.ne.s32.totalorder %s181, %s195
      %p197 = scmp.eq.s32.totalorder %s24, 0
      %p198 = por %p196, %p197
      %s199 = ssub.s32 %s18, %s25
      %p200 = scmp.eq.s32.totalorder %s199, 0
      %s202 = sadd.s32 %s201, 1
      %s203 = scalar_select %p200, %s201, %s202
      %p206 = pneg %p200
      %p207 = scmp.eq.s32.totalorder %s18, 1
      %p208 = por %p206, %p207
      %p209 = scmp.ne.s32.totalorder %s201, %s204
      %p210 = scmp.eq.s32.totalorder %s18, 0
      %p211 = por %p209, %p210
      %p212 = scmp.ne.s32.totalorder %s201, %s204
      %p213 = scmp.eq.s32.totalorder %s23, 1
      %p214 = por %p212, %p213
      %p215 = scmp.ne.s32.totalorder %s204, %s205
      %p216 = scmp.eq.s32.totalorder %s23, 0
      %p217 = por %p215, %p216
      %p218 = scmp.ne.s32.totalorder %s204, %s205
      %p219 = scmp.eq.s32.totalorder %s24, 1
      %p220 = por %p218, %p219
      %p222 = scmp.ne.s32.totalorder %s205, %s221
      %p223 = scmp.eq.s32.totalorder %s24, 0
      %p224 = por %p222, %p223
      %p225 = scmp.le.s32.totalorder 1, %s18
      %p226 = scmp.lt.s32.totalorder %s18, 3
      %p227 = pnand %p225, %p226
      %p228 = pneg %p227
      // Predicated region
      $region9: #{tpu_custom_call.1} parent=5 // pred_check
        _
      $region10: #{tpu_custom_call.1} parent=5 // pred_check_branch
        %230 = sbr.rel (%p227) target = $region12
      $region11: #{tpu_custom_call.1} parent=5 // pred_region
        %s231 = ssub.s32 %s18, 1
        // Predicated region
        $region13: #{tpu_custom_call.1} parent=11 // pred_check
          %p232 = pneg %p65
        $region14: #{tpu_custom_call.1} parent=11 // pred_check_branch
          %234 = sbr.rel (%p232) target = $region16
        $region15: #{tpu_custom_call.1} parent=11 // pred_region
          _
        $region16: #{tpu_custom_call.1} parent=11 // pred_fallthru
          _
        // Predicated region
        $region17: #{tpu_custom_call.1} parent=11 // pred_check
          %p235 = pneg %p86
        $region18: #{tpu_custom_call.1} parent=11 // pred_check_branch
          %237 = sbr.rel (%p235) target = $region20
        $region19: #{tpu_custom_call.1} parent=11 // pred_region
          _
        $region20: #{tpu_custom_call.1} parent=11 // pred_fallthru
          _
        // Predicated region
        $region21: #{tpu_custom_call.1} parent=11 // pred_check
          %p238 = pneg %p107
        $region22: #{tpu_custom_call.1} parent=11 // pred_check_branch
          %240 = sbr.rel (%p238) target = $region24
        $region23: #{tpu_custom_call.1} parent=11 // pred_region
          _
        $region24: #{tpu_custom_call.1} parent=11 // pred_fallthru
          _
        // Predicated region
        $region25: #{tpu_custom_call.1} parent=11 // pred_check
          %p241 = pneg %p128
        $region26: #{tpu_custom_call.1} parent=11 // pred_check_branch
          %243 = sbr.rel (%p241) target = $region28
        $region27: #{tpu_custom_call.1} parent=11 // pred_region
          _
        $region28: #{tpu_custom_call.1} parent=11 // pred_fallthru
          _
        // Predicated region
        $region29: #{tpu_custom_call.1} parent=11 // pred_check
          %p244 = pneg %p149
        $region30: #{tpu_custom_call.1} parent=11 // pred_check_branch
          %246 = sbr.rel (%p244) target = $region32
        $region31: #{tpu_custom_call.1} parent=11 // pred_region
          _
        $region32: #{tpu_custom_call.1} parent=11 // pred_fallthru
          _
        // Predicated region
        $region33: #{tpu_custom_call.1} parent=11 // pred_check
          %p247 = pneg %p170
        $region34: #{tpu_custom_call.1} parent=11 // pred_check_branch
          %249 = sbr.rel (%p247) target = $region36
        $region35: #{tpu_custom_call.1} parent=11 // pred_region
          _
        $region36: #{tpu_custom_call.1} parent=11 // pred_fallthru
          _
        // Predicated region
        $region37: #{tpu_custom_call.1} parent=11 // pred_check
          %p250 = pneg %p191
        $region38: #{tpu_custom_call.1} parent=11 // pred_check_branch
          %252 = sbr.rel (%p250) target = $region40
        $region39: #{tpu_custom_call.1} parent=11 // pred_region
          %s254 = ssub.s32 512, 512
          %255 = vsyncadd [#allocation4], %s254
          %s256 = sshll.u32 [#allocation3], 4
          %s257 = int_to_ptr.vmem [resolvable:$true] %s256
          %262 = dma.hbm_to_vmem [thread:$0]  %s7, 512, %s257, [#allocation4], 128, 128, 8
        $region40: #{tpu_custom_call.1} parent=11 // pred_fallthru
          _
      $region12: #{tpu_custom_call.1} parent=5 // pred_fallthru
        _
      %p263 = scmp.lt.s32.totalorder %s18, 2
      // Predicated region
      $region41: #{tpu_custom_call.1} parent=5 // pred_check
        %p264 = pneg %p263
      $region42: #{tpu_custom_call.1} parent=5 // pred_check_branch
        %266 = sbr.rel (%p264) target = $region44
      $region43: #{tpu_custom_call.1} parent=5 // pred_region
        // Predicated region
        $region45: #{tpu_custom_call.1} parent=43 // pred_check
          %p267 = pneg %p38
        $region46: #{tpu_custom_call.1} parent=43 // pred_check_branch
          %269 = sbr.rel (%p267) target = $region48
        $region47: #{tpu_custom_call.1} parent=43 // pred_region
          %p270 = scmp.lt.s32.totalorder %s18, 1
          %s271 = scalar_select %p270, %s18, 1
          %s272 = smul.addr %s271, 4
          %s273 = smul.addr %s272, 8
          %s274 = scalar_lea.vmem %s0, %s273
        $region48: #{tpu_custom_call.1} parent=43 // pred_fallthru
          _
      $region44: #{tpu_custom_call.1} parent=5 // pred_fallthru
        _
      %p275 = scmp.le.s32.totalorder 1, %s18
      %p276 = scmp.lt.s32.totalorder %s18, 3
      %p277 = pnand %p275, %p276
      %p278 = pneg %p277
      // Predicated region
      $region49: #{tpu_custom_call.1} parent=5 // pred_check
        _
      $region50: #{tpu_custom_call.1} parent=5 // pred_check_branch
        %280 = sbr.rel (%p277) target = $region52
      $region51: #{tpu_custom_call.1} parent=5 // pred_region
        %s281 = ssub.s32 %s18, 1
        // Predicated region
        $region53: #{tpu_custom_call.1} parent=51 // pred_check
          %p282 = pneg %p191
        $region54: #{tpu_custom_call.1} parent=51 // pred_check_branch
          %284 = sbr.rel (%p282) target = $region56
        $region55: #{tpu_custom_call.1} parent=51 // pred_region
          %285 = dma.done [#allocation4], 512
        $region56: #{tpu_custom_call.1} parent=51 // pred_fallthru
          _
        %p286 = scmp.lt.s32.totalorder %s23, 1
        %s287 = scalar_select %p286, %s23, 1
        %s288 = smul.addr %s287, 4
        %s289 = smul.addr %s288, 8
        %s290 = scalar_lea.vmem %s0, %s289
        %p291 = pneg %p44
        %p292 = pneg %p41
        %p293 = pneg %p65
        %p294 = pneg %p62
        %p295 = pneg %p86
        %p296 = pneg %p83
        %p297 = pneg %p107
        %p298 = pneg %p104
        %p299 = pneg %p128
        %p300 = pneg %p125
        %p301 = pneg %p149
        %p302 = pneg %p146
        %p303 = pneg %p170
        %p304 = pneg %p167
        %p305 = pneg %p191
        %p306 = pneg %p188
        %p307 = pneg %p217
        %p308 = pneg %p214
        %s309 = sand.u32 %s204, 1
        %s310 = scalar_lea.sflag [#allocation5], %s309
        %s311 = sand.u32 %s204, 1
        %s312 = smul.addr %s311, 32
        %s313 = scalar_lea.vmem [#allocation6], %s312
        %p314 = scmp.lt.s32.totalorder %s23, 1
        %s315 = scalar_select %p314, %s23, 1
        %s316 = smul.addr %s315, 4
        %s317 = smul.addr %s316, 8
        %s318 = scalar_lea.vmem %s0, %s317
        %v319 = vld [vmem:[%s318] sm:$0xff]
        %v320 = vld [vmem:[%s318 + $0x8] sm:$0xff]
        %v321 = vld [vmem:[%s318 + $0x10] sm:$0xff]
        %v322 = vld [vmem:[%s318 + $0x18] sm:$0xff]
        %v323 = vld [vmem:[%s1] sm:$0xff]
        %v324 = vld [vmem:[%s1 + $0x8] sm:$0xff]
        %v325 = vld [vmem:[%s1 + $0x10] sm:$0xff]
        %v326 = vld [vmem:[%s1 + $0x18] sm:$0xff]
        %v327 = vld [vmem:[%s1 + $0x20] sm:$0xff]
        %v328 = vld [vmem:[%s1 + $0x28] sm:$0xff]
        %v329 = vld [vmem:[%s1 + $0x30] sm:$0xff]
        %v330 = vld [vmem:[%s1 + $0x38] sm:$0xff]
        %v331 = vld [vmem:[%s2] sm:$0xff]
        %v332 = vld [vmem:[%s2 + $0x8] sm:$0xff]
        %v333 = vld [vmem:[%s2 + $0x10] sm:$0xff]
        %v334 = vld [vmem:[%s2 + $0x18] sm:$0xff]
        %v335 = vld [vmem:[%s2 + $0x20] sm:$0xff]
        %v336 = vld [vmem:[%s2 + $0x28] sm:$0xff]
        %v337 = vld [vmem:[%s2 + $0x30] sm:$0xff]
        %v338 = vld [vmem:[%s2 + $0x38] sm:$0xff]
        %340 = vset.pattern.permute.xlu0 0
        %341 = vperm.xlu0 %340, %v331
        %v342 = vpop.permute.xlu0 %341
        %345 = vset.pattern.permute.xlu0 0
        %346 = vperm.xlu0 %345, %v332
        %v347 = vpop.permute.xlu0 %346
        %350 = vset.pattern.permute.xlu0 0
        %351 = vperm.xlu0 %350, %v333
        %v352 = vpop.permute.xlu0 %351
        %355 = vset.pattern.permute.xlu0 0
        %356 = vperm.xlu0 %355, %v334
        %v357 = vpop.permute.xlu0 %356
        %360 = vset.pattern.permute.xlu0 0
        %361 = vperm.xlu0 %360, %v335
        %v362 = vpop.permute.xlu0 %361
        %365 = vset.pattern.permute.xlu0 0
        %366 = vperm.xlu0 %365, %v336
        %v367 = vpop.permute.xlu0 %366
        %370 = vset.pattern.permute.xlu0 0
        %371 = vperm.xlu0 %370, %v337
        %v372 = vpop.permute.xlu0 %371
        %375 = vset.pattern.permute.xlu0 0
        %376 = vperm.xlu0 %375, %v338
        %v377 = vpop.permute.xlu0 %376
        %vm379 = vcmask 261120
        %v381 = vsel %vm379, %v323, 0
        %v384 = vsel %vm379, %v324, 0
        %v387 = vsel %vm379, %v325, 0
        %v390 = vsel %vm379, %v326, 0
        %v393 = vsel %vm379, %v327, 0
        %v396 = vsel %vm379, %v328, 0
        %v399 = vsel %vm379, %v329, 0
        %v402 = vsel %vm379, %v330, 0
        %404 = vmatprep.subr.mxu0 0.0
        %405 = vmatpush1.msra.mxu0 %v319
        %406 = vmatprep.subr.mxu0 0.0
        %407 = vmatpush1.msra.mxu0 %v320
        %408 = vmatprep.subr.mxu0 0.0
        %409 = vmatpush1.msra.mxu0 %v321
        %410 = vmatprep.subr.mxu0 0.0
        %411 = vmatpush1.msra.mxu0 %v322
        %412 = vmatprep.subr.mxu0 0.0
        %413 = vmatpush1.msra.mxu0 0.0
        %414 = vmatprep.subr.mxu0 0.0
        %415 = vmatpush1.msra.mxu0 0.0
        %416 = vmatprep.subr.mxu0 0.0
        %417 = vmatpush1.msra.mxu0 0.0
        %418 = vmatprep.subr.mxu0 0.0
        %419 = vmatpush1.msra.mxu0 0.0
        %420 = vmatprep.subr.mxu0 0.0
        %421 = vmatpush1.msra.mxu0 0.0
        %422 = vmatprep.subr.mxu0 0.0
        %423 = vmatpush1.msra.mxu0 0.0
        %424 = vmatprep.subr.mxu0 0.0
        %425 = vmatpush1.msra.mxu0 0.0
        %426 = vmatprep.subr.mxu0 0.0
        %427 = vmatpush1.msra.mxu0 0.0
        %428 = vmatprep.subr.mxu0 0.0
        %429 = vmatpush1.msra.mxu0 0.0
        %430 = vmatprep.subr.mxu0 0.0
        %431 = vmatpush1.msra.mxu0 0.0
        %432 = vmatprep.subr.mxu0 0.0
        %433 = vmatpush1.msra.mxu0 0.0
        %434 = vmatprep.subr.mxu0 0.0
        %435 = vmatpush1.msra.mxu0 0.0
        %436 = vmatprep.subr.mxu0 0.0
        %437 = vmatpush1.msra.mxu0 0.0
        %438 = vmatprep.subr.mxu0 0.0
        %439 = vmatpush1.msra.mxu0 0.0
        %440 = vmatprep.subr.mxu0 0.0
        %441 = vmatpush1.msra.mxu0 0.0
        %442 = vmatprep.subr.mxu0 0.0
        %443 = vmatpush1.msra.mxu0 0.0
        %444 = vmatprep.subr.mxu0 0.0
        %445 = vmatpush1.msra.mxu0 0.0
        %446 = vmatprep.subr.mxu0 0.0
        %447 = vmatpush1.msra.mxu0 0.0
        %448 = vmatprep.subr.mxu0 0.0
        %449 = vmatpush1.msra.mxu0 0.0
        %450 = vmatprep.subr.mxu0 0.0
        %451 = vmatpush1.msra.mxu0 0.0
        %452 = vmatprep.subr.mxu0 0.0
        %453 = vmatpush1.msra.mxu0 0.0
        %454 = vmatprep.subr.mxu0 0.0
        %455 = vmatpush1.msra.mxu0 0.0
        %456 = vmatprep.subr.mxu0 0.0
        %457 = vmatpush1.msra.mxu0 0.0
        %458 = vmatprep.subr.mxu0 0.0
        %459 = vmatpush1.msra.mxu0 0.0
        %460 = vmatprep.subr.mxu0 0.0
        %461 = vmatpush1.msra.mxu0 0.0
        %462 = vmatprep.subr.mxu0 0.0
        %463 = vmatpush1.msra.mxu0 0.0
        %464 = vmatprep.subr.mxu0 0.0
        %465 = vmatpush1.msra.mxu0 0.0
        %466 = vmatprep.subr.mxu0 0.0
        %467 = vmatpush1.msra.mxu0 0.0
        %468 = vmatprep.mubr.f32.mxu0 0.0
        %469 = vmatmul.mubr.f32.gmra.mrb[0].mxu0 %v381
        %v470 = vpop.f32.mrb[0].mxu0
        %v471 = vadd.f32 %v342, %v470
        %v472 = vpop.f32.mrb[0].mxu0
        %473 = vmatprep.mubr.f32.mxu0 0.0
        %474 = vmatmul.mubr.f32.gmra.mrb[0].mxu0 %v384
        %v475 = vpop.f32.mrb[0].mxu0
        %v476 = vadd.f32 %v347, %v475
        %v477 = vpop.f32.mrb[0].mxu0
        %478 = vmatprep.mubr.f32.mxu0 0.0
        %479 = vmatmul.mubr.f32.gmra.mrb[0].mxu0 %v387
        %v480 = vpop.f32.mrb[0].mxu0
        %v481 = vadd.f32 %v352, %v480
        %v482 = vpop.f32.mrb[0].mxu0
        %483 = vmatprep.mubr.f32.mxu0 0.0
        %484 = vmatmul.mubr.f32.gmra.mrb[0].mxu0 %v390
        %v485 = vpop.f32.mrb[0].mxu0
        %v486 = vadd.f32 %v357, %v485
        %v487 = vpop.f32.mrb[0].mxu0
        %488 = vmatprep.mubr.f32.mxu0 0.0
        %489 = vmatmul.mubr.f32.gmra.mrb[0].mxu0 %v393
        %v490 = vpop.f32.mrb[0].mxu0
        %v491 = vadd.f32 %v362, %v490
        %v492 = vpop.f32.mrb[0].mxu0
        %493 = vmatprep.mubr.f32.mxu0 0.0
        %494 = vmatmul.mubr.f32.gmra.mrb[0].mxu0 %v396
        %v495 = vpop.f32.mrb[0].mxu0
        %v496 = vadd.f32 %v367, %v495
        %v497 = vpop.f32.mrb[0].mxu0
        %498 = vmatprep.mubr.f32.mxu0 0.0
        %499 = vmatmul.mubr.f32.gmra.mrb[0].mxu0 %v399
        %v500 = vpop.f32.mrb[0].mxu0
        %v501 = vadd.f32 %v372, %v500
        %v502 = vpop.f32.mrb[0].mxu0
        %503 = vmatprep.mubr.f32.mxu0 0.0
        %504 = vmatmul.mubr.f32.gmra.mrb[0].mxu0 %v402
        %v505 = vpop.f32.mrb[0].mxu0
        %v506 = vadd.f32 %v377, %v505
        %v507 = vpop.f32.mrb[0].mxu0
        %508 = vdwg.mxu0
        %v509 = vmax.f32 %v471, 0.0
        %v510 = vmax.f32 %v476, 0.0
        %v511 = vmax.f32 %v481, 0.0
        %v512 = vmax.f32 %v486, 0.0
        %v513 = vmax.f32 %v491, 0.0
        %v514 = vmax.f32 %v496, 0.0
        %v515 = vmax.f32 %v501, 0.0
        %v516 = vmax.f32 %v506, 0.0
        %v517 = vlaneseq
        %v518 = vand.u32 %v517, 127
        %vm519 = vcmp.lt.s32.totalorder %v518, 16
        %v520 = vsel %vm519, 1, 0
        %vm521 = vcmp.eq.s32.totalorder %v520, 1
        %v522 = vsel %vm521, %v513, 0.0
        %v523 = vsel %vm521, %v514, 0.0
        %v524 = vsel %vm521, %v515, 0.0
        %v525 = vsel %vm521, %v516, 0.0
        %v526 = vld [vmem:[%s5] sm:$0xff]
        %v527 = vrot.slane %v509, 4
        %v528 = vmax.f32 %v509, %v527
        %v529 = vrot.slane %v528, 2
        %v530 = vmax.f32 %v528, %v529
        %v531 = vrot.slane %v530, 1
        %v532 = vmax.f32 %v530, %v531
        %v533 = vsub.f32 %v509, %v532
        %v534 = vmul.f32 %v533, 1.442695
        %v535 = vpow.pop %v534
        %v536 = vrot.slane %v535, 4
        %v537 = vadd.f32 %v535, %v536
        %v538 = vrot.slane %v537, 2
        %v539 = vadd.f32 %v537, %v538
        %v540 = vrot.slane %v539, 1
        %v541 = vadd.f32 %v539, %v540
        %v542 = vrcp.pop %v541
        %v543 = vmul.f32 %v535, %v542
        %544 = vmatprep.subr.mxu0 0.0
        %545 = vmatpush1.xpose.msra.mxu0 %v522
        %546 = vmatprep.subr.mxu0 0.0
        %547 = vmatpush1.xpose.msra.mxu0 0.0
        %548 = vmatprep.subr.mxu0 0.0
        %549 = vmatpush1.xpose.msra.mxu0 0.0
        %550 = vmatprep.subr.mxu0 0.0
        %551 = vmatpush1.xpose.msra.mxu0 0.0
        %552 = vmatprep.subr.mxu0 0.0
        %553 = vmatpush1.xpose.msra.mxu0 0.0
        %554 = vmatprep.subr.mxu0 0.0
        %555 = vmatpush1.xpose.msra.mxu0 0.0
        %556 = vmatprep.subr.mxu0 0.0
        %557 = vmatpush1.xpose.msra.mxu0 0.0
        %558 = vmatprep.subr.mxu0 0.0
        %559 = vmatpush1.xpose.msra.mxu0 0.0
        %560 = vmatprep.subr.mxu0 0.0
        %561 = vmatpush1.xpose.msra.mxu0 0.0
        %562 = vmatprep.subr.mxu0 0.0
        %563 = vmatpush1.xpose.msra.mxu0 0.0
        %564 = vmatprep.subr.mxu0 0.0
        %565 = vmatpush1.xpose.msra.mxu0 0.0
        %566 = vmatprep.subr.mxu0 0.0
        %567 = vmatpush1.xpose.msra.mxu0 0.0
        %568 = vmatprep.subr.mxu0 0.0
        %569 = vmatpush1.xpose.msra.mxu0 0.0
        %570 = vmatprep.subr.mxu0 0.0
        %571 = vmatpush1.xpose.msra.mxu0 0.0
        %572 = vmatprep.subr.mxu0 0.0
        %573 = vmatpush1.xpose.msra.mxu0 0.0
        %574 = vmatprep.subr.mxu0 0.0
        %575 = vmatpush1.xpose.msra.mxu0 0.0
        %576 = vmatprep.subr.mxu0 0.0
        %577 = vmatpush1.xpose.msra.mxu0 0.0
        %578 = vmatprep.subr.mxu0 0.0
        %579 = vmatpush1.xpose.msra.mxu0 0.0
        %580 = vmatprep.subr.mxu0 0.0
        %581 = vmatpush1.xpose.msra.mxu0 0.0
        %582 = vmatprep.subr.mxu0 0.0
        %583 = vmatpush1.xpose.msra.mxu0 0.0
        %584 = vmatprep.subr.mxu0 0.0
        %585 = vmatpush1.xpose.msra.mxu0 0.0
        %586 = vmatprep.subr.mxu0 0.0
        %587 = vmatpush1.xpose.msra.mxu0 0.0
        %588 = vmatprep.subr.mxu0 0.0
        %589 = vmatpush1.xpose.msra.mxu0 0.0
        %590 = vmatprep.subr.mxu0 0.0
        %591 = vmatpush1.xpose.msra.mxu0 0.0
        %592 = vmatprep.subr.mxu0 0.0
        %593 = vmatpush1.xpose.msra.mxu0 0.0
        %594 = vmatprep.subr.mxu0 0.0
        %595 = vmatpush1.xpose.msra.mxu0 0.0
        %596 = vmatprep.subr.mxu0 0.0
        %597 = vmatpush1.xpose.msra.mxu0 0.0
        %598 = vmatprep.subr.mxu0 0.0
        %599 = vmatpush1.xpose.msra.mxu0 0.0
        %600 = vmatprep.subr.mxu0 0.0
        %601 = vmatpush1.xpose.msra.mxu0 0.0
        %602 = vmatprep.subr.mxu0 0.0
        %603 = vmatpush1.xpose.msra.mxu0 0.0
        %604 = vmatprep.subr.mxu0 0.0
        %605 = vmatpush1.xpose.msra.mxu0 0.0
        %606 = vmatprep.subr.mxu0 0.0
        %607 = vmatpush1.xpose.msra.mxu0 0.0
        %608 = vmatprep.mubr.f32.mxu0 0.0
        %609 = vmatmul.mubr.f32.gmra.mrb[0].mxu0 %v526
        %v610 = vpop.f32.mrb[0].mxu0
        %v611 = vadd.f32 0.0, %v610
        %v612 = vpop.f32.mrb[0].mxu0
        %613 = vdwg.mxu0
        %614 = vxpose.xlu0.b32.start [1/16] %v611, 128
        %615 = vxpose.xlu0.b32.cont [2/16] 0.0, 128
        %616 = vxpose.xlu0.b32.cont [3/16] 0.0, 128
        %617 = vxpose.xlu0.b32.cont [4/16] 0.0, 128
        %618 = vxpose.xlu0.b32.cont [5/16] 0.0, 128
        %619 = vxpose.xlu0.b32.cont [6/16] 0.0, 128
        %620 = vxpose.xlu0.b32.cont [7/16] 0.0, 128
        %621 = vxpose.xlu0.b32.cont [8/16] 0.0, 128
        %622 = vxpose.xlu0.b32.cont [9/16] 0.0, 128
        %623 = vxpose.xlu0.b32.cont [10/16] 0.0, 128
        %624 = vxpose.xlu0.b32.cont [11/16] 0.0, 128
        %625 = vxpose.xlu0.b32.cont [12/16] 0.0, 128
        %626 = vxpose.xlu0.b32.cont [13/16] 0.0, 128
        %627 = vxpose.xlu0.b32.cont [14/16] 0.0, 128
        %628 = vxpose.xlu0.b32.cont [15/16] 0.0, 128
        %629 = vxpose.xlu0.b32.end [16/16] 0.0, 128
        %v630 = vpop.trf.xlu0
        %v631 = vpop.trf.xlu0
        %v632 = vpop.trf.xlu0
        %v633 = vpop.trf.xlu0
        %v634 = vpop.trf.xlu0
        %v635 = vpop.trf.xlu0
        %v636 = vpop.trf.xlu0
        %v637 = vpop.trf.xlu0
        %v638 = vpop.trf.xlu0
        %v639 = vpop.trf.xlu0
        %v640 = vpop.trf.xlu0
        %v641 = vpop.trf.xlu0
        %v642 = vpop.trf.xlu0
        %v643 = vpop.trf.xlu0
        %v644 = vpop.trf.xlu0
        %v645 = vpop.trf.xlu0
        %vm646 = vcmask 64512
        %v648 = vsel %vm646, %v630, 0
        %650 = vmatprep.subr.mxu0 0.0
        %651 = vmatpush1.msra.mxu0 %v543
        %652 = vmatprep.subr.mxu0 0.0
        %653 = vmatpush1.msra.mxu0 0.0
        %654 = vmatprep.subr.mxu0 0.0
        %655 = vmatpush1.msra.mxu0 0.0
        %656 = vmatprep.subr.mxu0 0.0
        %657 = vmatpush1.msra.mxu0 0.0
        %658 = vmatprep.subr.mxu0 0.0
        %659 = vmatpush1.msra.mxu0 0.0
        %660 = vmatprep.subr.mxu0 0.0
        %661 = vmatpush1.msra.mxu0 0.0
        %662 = vmatprep.subr.mxu0 0.0
        %663 = vmatpush1.msra.mxu0 0.0
        %664 = vmatprep.subr.mxu0 0.0
        %665 = vmatpush1.msra.mxu0 0.0
        %666 = vmatprep.subr.mxu0 0.0
        %667 = vmatpush1.msra.mxu0 0.0
        %668 = vmatprep.subr.mxu0 0.0
        %669 = vmatpush1.msra.mxu0 0.0
        %670 = vmatprep.subr.mxu0 0.0
        %671 = vmatpush1.msra.mxu0 0.0
        %672 = vmatprep.subr.mxu0 0.0
        %673 = vmatpush1.msra.mxu0 0.0
        %674 = vmatprep.subr.mxu0 0.0
        %675 = vmatpush1.msra.mxu0 0.0
        %676 = vmatprep.subr.mxu0 0.0
        %677 = vmatpush1.msra.mxu0 0.0
        %678 = vmatprep.subr.mxu0 0.0
        %679 = vmatpush1.msra.mxu0 0.0
        %680 = vmatprep.subr.mxu0 0.0
        %681 = vmatpush1.msra.mxu0 0.0
        %682 = vmatprep.subr.mxu0 0.0
        %683 = vmatpush1.msra.mxu0 0.0
        %684 = vmatprep.subr.mxu0 0.0
        %685 = vmatpush1.msra.mxu0 0.0
        %686 = vmatprep.subr.mxu0 0.0
        %687 = vmatpush1.msra.mxu0 0.0
        %688 = vmatprep.subr.mxu0 0.0
        %689 = vmatpush1.msra.mxu0 0.0
        %690 = vmatprep.subr.mxu0 0.0
        %691 = vmatpush1.msra.mxu0 0.0
        %692 = vmatprep.subr.mxu0 0.0
        %693 = vmatpush1.msra.mxu0 0.0
        %694 = vmatprep.subr.mxu0 0.0
        %695 = vmatpush1.msra.mxu0 0.0
        %696 = vmatprep.subr.mxu0 0.0
        %697 = vmatpush1.msra.mxu0 0.0
        %698 = vmatprep.subr.mxu0 0.0
        %699 = vmatpush1.msra.mxu0 0.0
        %700 = vmatprep.subr.mxu0 0.0
        %701 = vmatpush1.msra.mxu0 0.0
        %702 = vmatprep.subr.mxu0 0.0
        %703 = vmatpush1.msra.mxu0 0.0
        %704 = vmatprep.subr.mxu0 0.0
        %705 = vmatpush1.msra.mxu0 0.0
        %706 = vmatprep.subr.mxu0 0.0
        %707 = vmatpush1.msra.mxu0 0.0
        %708 = vmatprep.subr.mxu0 0.0
        %709 = vmatpush1.msra.mxu0 0.0
        %710 = vmatprep.subr.mxu0 0.0
        %711 = vmatpush1.msra.mxu0 0.0
        %712 = vmatprep.subr.mxu0 0.0
        %713 = vmatpush1.msra.mxu0 0.0
        %714 = vmatprep.mubr.f32.mxu0 0.0
        %715 = vmatmul.mubr.f32.gmra.mrb[0].mxu0 %v648
        %v716 = vpop.f32.mrb[0].mxu0
        %v717 = vadd.f32 %v522, %v716
        %v718 = vpop.f32.mrb[0].mxu0
        %719 = vdwg.mxu0
        %720 = vst [vmem:[#allocation2] sm:$0xff] %v717
        %s721 = scalar_lea.vmem %s5, 8
        %v722 = vld [vmem:[%s721] sm:$0xff]
        %v723 = vrot.slane %v510, 4
        %v724 = vmax.f32 %v510, %v723
        %v725 = vrot.slane %v724, 2
        %v726 = vmax.f32 %v724, %v725
        %v727 = vrot.slane %v726, 1
        %v728 = vmax.f32 %v726, %v727
        %v729 = vsub.f32 %v510, %v728
        %v730 = vmul.f32 %v729, 1.442695
        %v731 = vpow.pop %v730
        %v732 = vrot.slane %v731, 4
        %v733 = vadd.f32 %v731, %v732
        %v734 = vrot.slane %v733, 2
        %v735 = vadd.f32 %v733, %v734
        %v736 = vrot.slane %v735, 1
        %v737 = vadd.f32 %v735, %v736
        %v738 = vrcp.pop %v737
        %v739 = vmul.f32 %v731, %v738
        %740 = vmatprep.subr.mxu0 0.0
        %741 = vmatpush1.xpose.msra.mxu0 %v523
        %742 = vmatprep.subr.mxu0 0.0
        %743 = vmatpush1.xpose.msra.mxu0 0.0
        %744 = vmatprep.subr.mxu0 0.0
        %745 = vmatpush1.xpose.msra.mxu0 0.0
        %746 = vmatprep.subr.mxu0 0.0
        %747 = vmatpush1.xpose.msra.mxu0 0.0
        %748 = vmatprep.subr.mxu0 0.0
        %749 = vmatpush1.xpose.msra.mxu0 0.0
        %750 = vmatprep.subr.mxu0 0.0
        %751 = vmatpush1.xpose.msra.mxu0 0.0
        %752 = vmatprep.subr.mxu0 0.0
        %753 = vmatpush1.xpose.msra.mxu0 0.0
        %754 = vmatprep.subr.mxu0 0.0
        %755 = vmatpush1.xpose.msra.mxu0 0.0
        %756 = vmatprep.subr.mxu0 0.0
        %757 = vmatpush1.xpose.msra.mxu0 0.0
        %758 = vmatprep.subr.mxu0 0.0
        %759 = vmatpush1.xpose.msra.mxu0 0.0
        %760 = vmatprep.subr.mxu0 0.0
        %761 = vmatpush1.xpose.msra.mxu0 0.0
        %762 = vmatprep.subr.mxu0 0.0
        %763 = vmatpush1.xpose.msra.mxu0 0.0
        %764 = vmatprep.subr.mxu0 0.0
        %765 = vmatpush1.xpose.msra.mxu0 0.0
        %766 = vmatprep.subr.mxu0 0.0
        %767 = vmatpush1.xpose.msra.mxu0 0.0
        %768 = vmatprep.subr.mxu0 0.0
        %769 = vmatpush1.xpose.msra.mxu0 0.0
        %770 = vmatprep.subr.mxu0 0.0
        %771 = vmatpush1.xpose.msra.mxu0 0.0
        %772 = vmatprep.subr.mxu0 0.0
        %773 = vmatpush1.xpose.msra.mxu0 0.0
        %774 = vmatprep.subr.mxu0 0.0
        %775 = vmatpush1.xpose.msra.mxu0 0.0
        %776 = vmatprep.subr.mxu0 0.0
        %777 = vmatpush1.xpose.msra.mxu0 0.0
        %778 = vmatprep.subr.mxu0 0.0
        %779 = vmatpush1.xpose.msra.mxu0 0.0
        %780 = vmatprep.subr.mxu0 0.0
        %781 = vmatpush1.xpose.msra.mxu0 0.0
        %782 = vmatprep.subr.mxu0 0.0
        %783 = vmatpush1.xpose.msra.mxu0 0.0
        %784 = vmatprep.subr.mxu0 0.0
        %785 = vmatpush1.xpose.msra.mxu0 0.0
        %786 = vmatprep.subr.mxu0 0.0
        %787 = vmatpush1.xpose.msra.mxu0 0.0
        %788 = vmatprep.subr.mxu0 0.0
        %789 = vmatpush1.xpose.msra.mxu0 0.0
        %790 = vmatprep.subr.mxu0 0.0
        %791 = vmatpush1.xpose.msra.mxu0 0.0
        %792 = vmatprep.subr.mxu0 0.0
        %793 = vmatpush1.xpose.msra.mxu0 0.0
        %794 = vmatprep.subr.mxu0 0.0
        %795 = vmatpush1.xpose.msra.mxu0 0.0
        %796 = vmatprep.subr.mxu0 0.0
        %797 = vmatpush1.xpose.msra.mxu0 0.0
        %798 = vmatprep.subr.mxu0 0.0
        %799 = vmatpush1.xpose.msra.mxu0 0.0
        %800 = vmatprep.subr.mxu0 0.0
        %801 = vmatpush1.xpose.msra.mxu0 0.0
        %802 = vmatprep.subr.mxu0 0.0
        %803 = vmatpush1.xpose.msra.mxu0 0.0
        %804 = vmatprep.mubr.f32.mxu0 0.0
        %805 = vmatmul.mubr.f32.gmra.mrb[0].mxu0 %v722
        %v806 = vpop.f32.mrb[0].mxu0
        %v807 = vadd.f32 0.0, %v806
        %v808 = vpop.f32.mrb[0].mxu0
        %809 = vdwg.mxu0
        %810 = vxpose.xlu0.b32.start [1/16] %v807, 128
        %811 = vxpose.xlu0.b32.cont [2/16] 0.0, 128
        %812 = vxpose.xlu0.b32.cont [3/16] 0.0, 128
        %813 = vxpose.xlu0.b32.cont [4/16] 0.0, 128
        %814 = vxpose.xlu0.b32.cont [5/16] 0.0, 128
        %815 = vxpose.xlu0.b32.cont [6/16] 0.0, 128
        %816 = vxpose.xlu0.b32.cont [7/16] 0.0, 128
        %817 = vxpose.xlu0.b32.cont [8/16] 0.0, 128
        %818 = vxpose.xlu0.b32.cont [9/16] 0.0, 128
        %819 = vxpose.xlu0.b32.cont [10/16] 0.0, 128
        %820 = vxpose.xlu0.b32.cont [11/16] 0.0, 128
        %821 = vxpose.xlu0.b32.cont [12/16] 0.0, 128
        %822 = vxpose.xlu0.b32.cont [13/16] 0.0, 128
        %823 = vxpose.xlu0.b32.cont [14/16] 0.0, 128
        %824 = vxpose.xlu0.b32.cont [15/16] 0.0, 128
        %825 = vxpose.xlu0.b32.end [16/16] 0.0, 128
        %v826 = vpop.trf.xlu0
        %v827 = vpop.trf.xlu0
        %v828 = vpop.trf.xlu0
        %v829 = vpop.trf.xlu0
        %v830 = vpop.trf.xlu0
        %v831 = vpop.trf.xlu0
        %v832 = vpop.trf.xlu0
        %v833 = vpop.trf.xlu0
        %v834 = vpop.trf.xlu0
        %v835 = vpop.trf.xlu0
        %v836 = vpop.trf.xlu0
        %v837 = vpop.trf.xlu0
        %v838 = vpop.trf.xlu0
        %v839 = vpop.trf.xlu0
        %v840 = vpop.trf.xlu0
        %v841 = vpop.trf.xlu0
        %v843 = vsel %vm646, %v826, 0
        %845 = vmatprep.subr.mxu0 0.0
        %846 = vmatpush1.msra.mxu0 %v739
        %847 = vmatprep.subr.mxu0 0.0
        %848 = vmatpush1.msra.mxu0 0.0
        %849 = vmatprep.subr.mxu0 0.0
        %850 = vmatpush1.msra.mxu0 0.0
        %851 = vmatprep.subr.mxu0 0.0
        %852 = vmatpush1.msra.mxu0 0.0
        %853 = vmatprep.subr.mxu0 0.0
        %854 = vmatpush1.msra.mxu0 0.0
        %855 = vmatprep.subr.mxu0 0.0
        %856 = vmatpush1.msra.mxu0 0.0
        %857 = vmatprep.subr.mxu0 0.0
        %858 = vmatpush1.msra.mxu0 0.0
        %859 = vmatprep.subr.mxu0 0.0
        %860 = vmatpush1.msra.mxu0 0.0
        %861 = vmatprep.subr.mxu0 0.0
        %862 = vmatpush1.msra.mxu0 0.0
        %863 = vmatprep.subr.mxu0 0.0
        %864 = vmatpush1.msra.mxu0 0.0
        %865 = vmatprep.subr.mxu0 0.0
        %866 = vmatpush1.msra.mxu0 0.0
        %867 = vmatprep.subr.mxu0 0.0
        %868 = vmatpush1.msra.mxu0 0.0
        %869 = vmatprep.subr.mxu0 0.0
        %870 = vmatpush1.msra.mxu0 0.0
        %871 = vmatprep.subr.mxu0 0.0
        %872 = vmatpush1.msra.mxu0 0.0
        %873 = vmatprep.subr.mxu0 0.0
        %874 = vmatpush1.msra.mxu0 0.0
        %875 = vmatprep.subr.mxu0 0.0
        %876 = vmatpush1.msra.mxu0 0.0
        %877 = vmatprep.subr.mxu0 0.0
        %878 = vmatpush1.msra.mxu0 0.0
        %879 = vmatprep.subr.mxu0 0.0
        %880 = vmatpush1.msra.mxu0 0.0
        %881 = vmatprep.subr.mxu0 0.0
        %882 = vmatpush1.msra.mxu0 0.0
        %883 = vmatprep.subr.mxu0 0.0
        %884 = vmatpush1.msra.mxu0 0.0
        %885 = vmatprep.subr.mxu0 0.0
        %886 = vmatpush1.msra.mxu0 0.0
        %887 = vmatprep.subr.mxu0 0.0
        %888 = vmatpush1.msra.mxu0 0.0
        %889 = vmatprep.subr.mxu0 0.0
        %890 = vmatpush1.msra.mxu0 0.0
        %891 = vmatprep.subr.mxu0 0.0
        %892 = vmatpush1.msra.mxu0 0.0
        %893 = vmatprep.subr.mxu0 0.0
        %894 = vmatpush1.msra.mxu0 0.0
        %895 = vmatprep.subr.mxu0 0.0
        %896 = vmatpush1.msra.mxu0 0.0
        %897 = vmatprep.subr.mxu0 0.0
        %898 = vmatpush1.msra.mxu0 0.0
        %899 = vmatprep.subr.mxu0 0.0
        %900 = vmatpush1.msra.mxu0 0.0
        %901 = vmatprep.subr.mxu0 0.0
        %902 = vmatpush1.msra.mxu0 0.0
        %903 = vmatprep.subr.mxu0 0.0
        %904 = vmatpush1.msra.mxu0 0.0
        %905 = vmatprep.subr.mxu0 0.0
        %906 = vmatpush1.msra.mxu0 0.0
        %907 = vmatprep.subr.mxu0 0.0
        %908 = vmatpush1.msra.mxu0 0.0
        %909 = vmatprep.mubr.f32.mxu0 0.0
        %910 = vmatmul.mubr.f32.gmra.mrb[0].mxu0 %v843
        %v911 = vpop.f32.mrb[0].mxu0
        %v912 = vadd.f32 %v523, %v911
        %v913 = vpop.f32.mrb[0].mxu0
        %914 = vdwg.mxu0
        %915 = vst [vmem:[#allocation2 + $0x8] sm:$0xff] %v912
        %s916 = scalar_lea.vmem %s5, 16
        %v917 = vld [vmem:[%s916] sm:$0xff]
        %v918 = vrot.slane %v511, 4
        %v919 = vmax.f32 %v511, %v918
        %v920 = vrot.slane %v919, 2
        %v921 = vmax.f32 %v919, %v920
        %v922 = vrot.slane %v921, 1
        %v923 = vmax.f32 %v921, %v922
        %v924 = vsub.f32 %v511, %v923
        %v925 = vmul.f32 %v924, 1.442695
        %v926 = vpow.pop %v925
        %v927 = vrot.slane %v926, 4
        %v928 = vadd.f32 %v926, %v927
        %v929 = vrot.slane %v928, 2
        %v930 = vadd.f32 %v928, %v929
        %v931 = vrot.slane %v930, 1
        %v932 = vadd.f32 %v930, %v931
        %v933 = vrcp.pop %v932
        %v934 = vmul.f32 %v926, %v933
        %935 = vmatprep.subr.mxu0 0.0
        %936 = vmatpush1.xpose.msra.mxu0 %v524
        %937 = vmatprep.subr.mxu0 0.0
        %938 = vmatpush1.xpose.msra.mxu0 0.0
        %939 = vmatprep.subr.mxu0 0.0
        %940 = vmatpush1.xpose.msra.mxu0 0.0
        %941 = vmatprep.subr.mxu0 0.0
        %942 = vmatpush1.xpose.msra.mxu0 0.0
        %943 = vmatprep.subr.mxu0 0.0
        %944 = vmatpush1.xpose.msra.mxu0 0.0
        %945 = vmatprep.subr.mxu0 0.0
        %946 = vmatpush1.xpose.msra.mxu0 0.0
        %947 = vmatprep.subr.mxu0 0.0
        %948 = vmatpush1.xpose.msra.mxu0 0.0
        %949 = vmatprep.subr.mxu0 0.0
        %950 = vmatpush1.xpose.msra.mxu0 0.0
        %951 = vmatprep.subr.mxu0 0.0
        %952 = vmatpush1.xpose.msra.mxu0 0.0
        %953 = vmatprep.subr.mxu0 0.0
        %954 = vmatpush1.xpose.msra.mxu0 0.0
        %955 = vmatprep.subr.mxu0 0.0
        %956 = vmatpush1.xpose.msra.mxu0 0.0
        %957 = vmatprep.subr.mxu0 0.0
        %958 = vmatpush1.xpose.msra.mxu0 0.0
        %959 = vmatprep.subr.mxu0 0.0
        %960 = vmatpush1.xpose.msra.mxu0 0.0
        %961 = vmatprep.subr.mxu0 0.0
        %962 = vmatpush1.xpose.msra.mxu0 0.0
        %963 = vmatprep.subr.mxu0 0.0
        %964 = vmatpush1.xpose.msra.mxu0 0.0
        %965 = vmatprep.subr.mxu0 0.0
        %966 = vmatpush1.xpose.msra.mxu0 0.0
        %967 = vmatprep.subr.mxu0 0.0
        %968 = vmatpush1.xpose.msra.mxu0 0.0
        %969 = vmatprep.subr.mxu0 0.0
        %970 = vmatpush1.xpose.msra.mxu0 0.0
        %971 = vmatprep.subr.mxu0 0.0
        %972 = vmatpush1.xpose.msra.mxu0 0.0
        %973 = vmatprep.subr.mxu0 0.0
        %974 = vmatpush1.xpose.msra.mxu0 0.0
        %975 = vmatprep.subr.mxu0 0.0
        %976 = vmatpush1.xpose.msra.mxu0 0.0
        %977 = vmatprep.subr.mxu0 0.0
        %978 = vmatpush1.xpose.msra.mxu0 0.0
        %979 = vmatprep.subr.mxu0 0.0
        %980 = vmatpush1.xpose.msra.mxu0 0.0
        %981 = vmatprep.subr.mxu0 0.0
        %982 = vmatpush1.xpose.msra.mxu0 0.0
        %983 = vmatprep.subr.mxu0 0.0
        %984 = vmatpush1.xpose.msra.mxu0 0.0
        %985 = vmatprep.subr.mxu0 0.0
        %986 = vmatpush1.xpose.msra.mxu0 0.0
        %987 = vmatprep.subr.mxu0 0.0
        %988 = vmatpush1.xpose.msra.mxu0 0.0
        %989 = vmatprep.subr.mxu0 0.0
        %990 = vmatpush1.xpose.msra.mxu0 0.0
        %991 = vmatprep.subr.mxu0 0.0
        %992 = vmatpush1.xpose.msra.mxu0 0.0
        %993 = vmatprep.subr.mxu0 0.0
        %994 = vmatpush1.xpose.msra.mxu0 0.0
        %995 = vmatprep.subr.mxu0 0.0
        %996 = vmatpush1.xpose.msra.mxu0 0.0
        %997 = vmatprep.subr.mxu0 0.0
        %998 = vmatpush1.xpose.msra.mxu0 0.0
        %999 = vmatprep.mubr.f32.mxu0 0.0
        %1000 = vmatmul.mubr.f32.gmra.mrb[0].mxu0 %v917
        %v1001 = vpop.f32.mrb[0].mxu0
        %v1002 = vadd.f32 0.0, %v1001
        %v1003 = vpop.f32.mrb[0].mxu0
        %1004 = vdwg.mxu0
        %1005 = vxpose.xlu0.b32.start [1/16] %v1002, 128
        %1006 = vxpose.xlu0.b32.cont [2/16] 0.0, 128
        %1007 = vxpose.xlu0.b32.cont [3/16] 0.0, 128
        %1008 = vxpose.xlu0.b32.cont [4/16] 0.0, 128
        %1009 = vxpose.xlu0.b32.cont [5/16] 0.0, 128
        %1010 = vxpose.xlu0.b32.cont [6/16] 0.0, 128
        %1011 = vxpose.xlu0.b32.cont [7/16] 0.0, 128
        %1012 = vxpose.xlu0.b32.cont [8/16] 0.0, 128
        %1013 = vxpose.xlu0.b32.cont [9/16] 0.0, 128
        %1014 = vxpose.xlu0.b32.cont [10/16] 0.0, 128
        %1015 = vxpose.xlu0.b32.cont [11/16] 0.0, 128
        %1016 = vxpose.xlu0.b32.cont [12/16] 0.0, 128
        %1017 = vxpose.xlu0.b32.cont [13/16] 0.0, 128
        %1018 = vxpose.xlu0.b32.cont [14/16] 0.0, 128
        %1019 = vxpose.xlu0.b32.cont [15/16] 0.0, 128
        %1020 = vxpose.xlu0.b32.end [16/16] 0.0, 128
        %v1021 = vpop.trf.xlu0
        %v1022 = vpop.trf.xlu0
        %v1023 = vpop.trf.xlu0
        %v1024 = vpop.trf.xlu0
        %v1025 = vpop.trf.xlu0
        %v1026 = vpop.trf.xlu0
        %v1027 = vpop.trf.xlu0
        %v1028 = vpop.trf.xlu0
        %v1029 = vpop.trf.xlu0
        %v1030 = vpop.trf.xlu0
        %v1031 = vpop.trf.xlu0
        %v1032 = vpop.trf.xlu0
        %v1033 = vpop.trf.xlu0
        %v1034 = vpop.trf.xlu0
        %v1035 = vpop.trf.xlu0
        %v1036 = vpop.trf.xlu0
        %v1038 = vsel %vm646, %v1021, 0
        %1040 = vmatprep.subr.mxu0 0.0
        %1041 = vmatpush1.msra.mxu0 %v934
        %1042 = vmatprep.subr.mxu0 0.0
        %1043 = vmatpush1.msra.mxu0 0.0
        %1044 = vmatprep.subr.mxu0 0.0
        %1045 = vmatpush1.msra.mxu0 0.0
        %1046 = vmatprep.subr.mxu0 0.0
        %1047 = vmatpush1.msra.mxu0 0.0
        %1048 = vmatprep.subr.mxu0 0.0
        %1049 = vmatpush1.msra.mxu0 0.0
        %1050 = vmatprep.subr.mxu0 0.0
        %1051 = vmatpush1.msra.mxu0 0.0
        %1052 = vmatprep.subr.mxu0 0.0
        %1053 = vmatpush1.msra.mxu0 0.0
        %1054 = vmatprep.subr.mxu0 0.0
        %1055 = vmatpush1.msra.mxu0 0.0
        %1056 = vmatprep.subr.mxu0 0.0
        %1057 = vmatpush1.msra.mxu0 0.0
        %1058 = vmatprep.subr.mxu0 0.0
        %1059 = vmatpush1.msra.mxu0 0.0
        %1060 = vmatprep.subr.mxu0 0.0
        %1061 = vmatpush1.msra.mxu0 0.0
        %1062 = vmatprep.subr.mxu0 0.0
        %1063 = vmatpush1.msra.mxu0 0.0
        %1064 = vmatprep.subr.mxu0 0.0
        %1065 = vmatpush1.msra.mxu0 0.0
        %1066 = vmatprep.subr.mxu0 0.0
        %1067 = vmatpush1.msra.mxu0 0.0
        %1068 = vmatprep.subr.mxu0 0.0
        %1069 = vmatpush1.msra.mxu0 0.0
        %1070 = vmatprep.subr.mxu0 0.0
        %1071 = vmatpush1.msra.mxu0 0.0
        %1072 = vmatprep.subr.mxu0 0.0
        %1073 = vmatpush1.msra.mxu0 0.0
        %1074 = vmatprep.subr.mxu0 0.0
        %1075 = vmatpush1.msra.mxu0 0.0
        %1076 = vmatprep.subr.mxu0 0.0
        %1077 = vmatpush1.msra.mxu0 0.0
        %1078 = vmatprep.subr.mxu0 0.0
        %1079 = vmatpush1.msra.mxu0 0.0
        %1080 = vmatprep.subr.mxu0 0.0
        %1081 = vmatpush1.msra.mxu0 0.0
        %1082 = vmatprep.subr.mxu0 0.0
        %1083 = vmatpush1.msra.mxu0 0.0
        %1084 = vmatprep.subr.mxu0 0.0
        %1085 = vmatpush1.msra.mxu0 0.0
        %1086 = vmatprep.subr.mxu0 0.0
        %1087 = vmatpush1.msra.mxu0 0.0
        %1088 = vmatprep.subr.mxu0 0.0
        %1089 = vmatpush1.msra.mxu0 0.0
        %1090 = vmatprep.subr.mxu0 0.0
        %1091 = vmatpush1.msra.mxu0 0.0
        %1092 = vmatprep.subr.mxu0 0.0
        %1093 = vmatpush1.msra.mxu0 0.0
        %1094 = vmatprep.subr.mxu0 0.0
        %1095 = vmatpush1.msra.mxu0 0.0
        %1096 = vmatprep.subr.mxu0 0.0
        %1097 = vmatpush1.msra.mxu0 0.0
        %1098 = vmatprep.subr.mxu0 0.0
        %1099 = vmatpush1.msra.mxu0 0.0
        %1100 = vmatprep.subr.mxu0 0.0
        %1101 = vmatpush1.msra.mxu0 0.0
        %1102 = vmatprep.subr.mxu0 0.0
        %1103 = vmatpush1.msra.mxu0 0.0
        %1104 = vmatprep.mubr.f32.mxu0 0.0
        %1105 = vmatmul.mubr.f32.gmra.mrb[0].mxu0 %v1038
        %v1106 = vpop.f32.mrb[0].mxu0
        %v1107 = vadd.f32 %v524, %v1106
        %v1108 = vpop.f32.mrb[0].mxu0
        %1109 = vdwg.mxu0
        %1110 = vst [vmem:[#allocation2 + $0x10] sm:$0xff] %v1107
        %s1111 = scalar_lea.vmem %s5, 24
        %v1112 = vld [vmem:[%s1111] sm:$0xff]
        %v1113 = vrot.slane %v512, 4
        %v1114 = vmax.f32 %v512, %v1113
        %v1115 = vrot.slane %v1114, 2
        %v1116 = vmax.f32 %v1114, %v1115
        %v1117 = vrot.slane %v1116, 1
        %v1118 = vmax.f32 %v1116, %v1117
        %v1119 = vsub.f32 %v512, %v1118
        %v1120 = vmul.f32 %v1119, 1.442695
        %v1121 = vpow.pop %v1120
        %v1122 = vrot.slane %v1121, 4
        %v1123 = vadd.f32 %v1121, %v1122
        %v1124 = vrot.slane %v1123, 2
        %v1125 = vadd.f32 %v1123, %v1124
        %v1126 = vrot.slane %v1125, 1
        %v1127 = vadd.f32 %v1125, %v1126
        %v1128 = vrcp.pop %v1127
        %v1129 = vmul.f32 %v1121, %v1128
        %1130 = vmatprep.subr.mxu0 0.0
        %1131 = vmatpush1.xpose.msra.mxu0 %v525
        %1132 = vmatprep.subr.mxu0 0.0
        %1133 = vmatpush1.xpose.msra.mxu0 0.0
        %1134 = vmatprep.subr.mxu0 0.0
        %1135 = vmatpush1.xpose.msra.mxu0 0.0
        %1136 = vmatprep.subr.mxu0 0.0
        %1137 = vmatpush1.xpose.msra.mxu0 0.0
        %1138 = vmatprep.subr.mxu0 0.0
        %1139 = vmatpush1.xpose.msra.mxu0 0.0
        %1140 = vmatprep.subr.mxu0 0.0
        %1141 = vmatpush1.xpose.msra.mxu0 0.0
        %1142 = vmatprep.subr.mxu0 0.0
        %1143 = vmatpush1.xpose.msra.mxu0 0.0
        %1144 = vmatprep.subr.mxu0 0.0
        %1145 = vmatpush1.xpose.msra.mxu0 0.0
        %1146 = vmatprep.subr.mxu0 0.0
        %1147 = vmatpush1.xpose.msra.mxu0 0.0
        %1148 = vmatprep.subr.mxu0 0.0
        %1149 = vmatpush1.xpose.msra.mxu0 0.0
        %1150 = vmatprep.subr.mxu0 0.0
        %1151 = vmatpush1.xpose.msra.mxu0 0.0
        %1152 = vmatprep.subr.mxu0 0.0
        %1153 = vmatpush1.xpose.msra.mxu0 0.0
        %1154 = vmatprep.subr.mxu0 0.0
        %1155 = vmatpush1.xpose.msra.mxu0 0.0
        %1156 = vmatprep.subr.mxu0 0.0
        %1157 = vmatpush1.xpose.msra.mxu0 0.0
        %1158 = vmatprep.subr.mxu0 0.0
        %1159 = vmatpush1.xpose.msra.mxu0 0.0
        %1160 = vmatprep.subr.mxu0 0.0
        %1161 = vmatpush1.xpose.msra.mxu0 0.0
        %1162 = vmatprep.subr.mxu0 0.0
        %1163 = vmatpush1.xpose.msra.mxu0 0.0
        %1164 = vmatprep.subr.mxu0 0.0
        %1165 = vmatpush1.xpose.msra.mxu0 0.0
        %1166 = vmatprep.subr.mxu0 0.0
        %1167 = vmatpush1.xpose.msra.mxu0 0.0
        %1168 = vmatprep.subr.mxu0 0.0
        %1169 = vmatpush1.xpose.msra.mxu0 0.0
        %1170 = vmatprep.subr.mxu0 0.0
        %1171 = vmatpush1.xpose.msra.mxu0 0.0
        %1172 = vmatprep.subr.mxu0 0.0
        %1173 = vmatpush1.xpose.msra.mxu0 0.0
        %1174 = vmatprep.subr.mxu0 0.0
        %1175 = vmatpush1.xpose.msra.mxu0 0.0
        %1176 = vmatprep.subr.mxu0 0.0
        %1177 = vmatpush1.xpose.msra.mxu0 0.0
        %1178 = vmatprep.subr.mxu0 0.0
        %1179 = vmatpush1.xpose.msra.mxu0 0.0
        %1180 = vmatprep.subr.mxu0 0.0
        %1181 = vmatpush1.xpose.msra.mxu0 0.0
        %1182 = vmatprep.subr.mxu0 0.0
        %1183 = vmatpush1.xpose.msra.mxu0 0.0
        %1184 = vmatprep.subr.mxu0 0.0
        %1185 = vmatpush1.xpose.msra.mxu0 0.0
        %1186 = vmatprep.subr.mxu0 0.0
        %1187 = vmatpush1.xpose.msra.mxu0 0.0
        %1188 = vmatprep.subr.mxu0 0.0
        %1189 = vmatpush1.xpose.msra.mxu0 0.0
        %1190 = vmatprep.subr.mxu0 0.0
        %1191 = vmatpush1.xpose.msra.mxu0 0.0
        %1192 = vmatprep.subr.mxu0 0.0
        %1193 = vmatpush1.xpose.msra.mxu0 0.0
        %1194 = vmatprep.mubr.f32.mxu0 0.0
        %1195 = vmatmul.mubr.f32.gmra.mrb[0].mxu0 %v1112
        %v1196 = vpop.f32.mrb[0].mxu0
        %v1197 = vadd.f32 0.0, %v1196
        %v1198 = vpop.f32.mrb[0].mxu0
        %1199 = vdwg.mxu0
        %1200 = vxpose.xlu0.b32.start [1/16] %v1197, 128
        %1201 = vxpose.xlu0.b32.cont [2/16] 0.0, 128
        %1202 = vxpose.xlu0.b32.cont [3/16] 0.0, 128
        %1203 = vxpose.xlu0.b32.cont [4/16] 0.0, 128
        %1204 = vxpose.xlu0.b32.cont [5/16] 0.0, 128
        %1205 = vxpose.xlu0.b32.cont [6/16] 0.0, 128
        %1206 = vxpose.xlu0.b32.cont [7/16] 0.0, 128
        %1207 = vxpose.xlu0.b32.cont [8/16] 0.0, 128
        %1208 = vxpose.xlu0.b32.cont [9/16] 0.0, 128
        %1209 = vxpose.xlu0.b32.cont [10/16] 0.0, 128
        %1210 = vxpose.xlu0.b32.cont [11/16] 0.0, 128
        %1211 = vxpose.xlu0.b32.cont [12/16] 0.0, 128
        %1212 = vxpose.xlu0.b32.cont [13/16] 0.0, 128
        %1213 = vxpose.xlu0.b32.cont [14/16] 0.0, 128
        %1214 = vxpose.xlu0.b32.cont [15/16] 0.0, 128
        %1215 = vxpose.xlu0.b32.end [16/16] 0.0, 128
        %v1216 = vpop.trf.xlu0
        %v1217 = vpop.trf.xlu0
        %v1218 = vpop.trf.xlu0
        %v1219 = vpop.trf.xlu0
        %v1220 = vpop.trf.xlu0
        %v1221 = vpop.trf.xlu0
        %v1222 = vpop.trf.xlu0
        %v1223 = vpop.trf.xlu0
        %v1224 = vpop.trf.xlu0
        %v1225 = vpop.trf.xlu0
        %v1226 = vpop.trf.xlu0
        %v1227 = vpop.trf.xlu0
        %v1228 = vpop.trf.xlu0
        %v1229 = vpop.trf.xlu0
        %v1230 = vpop.trf.xlu0
        %v1231 = vpop.trf.xlu0
        %v1233 = vsel %vm646, %v1216, 0
        %1235 = vmatprep.subr.mxu0 0.0
        %1236 = vmatpush1.msra.mxu0 %v1129
        %1237 = vmatprep.subr.mxu0 0.0
        %1238 = vmatpush1.msra.mxu0 0.0
        %1239 = vmatprep.subr.mxu0 0.0
        %1240 = vmatpush1.msra.mxu0 0.0
        %1241 = vmatprep.subr.mxu0 0.0
        %1242 = vmatpush1.msra.mxu0 0.0
        %1243 = vmatprep.subr.mxu0 0.0
        %1244 = vmatpush1.msra.mxu0 0.0
        %1245 = vmatprep.subr.mxu0 0.0
        %1246 = vmatpush1.msra.mxu0 0.0
        %1247 = vmatprep.subr.mxu0 0.0
        %1248 = vmatpush1.msra.mxu0 0.0
        %1249 = vmatprep.subr.mxu0 0.0
        %1250 = vmatpush1.msra.mxu0 0.0
        %1251 = vmatprep.subr.mxu0 0.0
        %1252 = vmatpush1.msra.mxu0 0.0
        %1253 = vmatprep.subr.mxu0 0.0
        %1254 = vmatpush1.msra.mxu0 0.0
        %1255 = vmatprep.subr.mxu0 0.0
        %1256 = vmatpush1.msra.mxu0 0.0
        %1257 = vmatprep.subr.mxu0 0.0
        %1258 = vmatpush1.msra.mxu0 0.0
        %1259 = vmatprep.subr.mxu0 0.0
        %1260 = vmatpush1.msra.mxu0 0.0
        %1261 = vmatprep.subr.mxu0 0.0
        %1262 = vmatpush1.msra.mxu0 0.0
        %1263 = vmatprep.subr.mxu0 0.0
        %1264 = vmatpush1.msra.mxu0 0.0
        %1265 = vmatprep.subr.mxu0 0.0
        %1266 = vmatpush1.msra.mxu0 0.0
        %1267 = vmatprep.subr.mxu0 0.0
        %1268 = vmatpush1.msra.mxu0 0.0
        %1269 = vmatprep.subr.mxu0 0.0
        %1270 = vmatpush1.msra.mxu0 0.0
        %1271 = vmatprep.subr.mxu0 0.0
        %1272 = vmatpush1.msra.mxu0 0.0
        %1273 = vmatprep.subr.mxu0 0.0
        %1274 = vmatpush1.msra.mxu0 0.0
        %1275 = vmatprep.subr.mxu0 0.0
        %1276 = vmatpush1.msra.mxu0 0.0
        %1277 = vmatprep.subr.mxu0 0.0
        %1278 = vmatpush1.msra.mxu0 0.0
        %1279 = vmatprep.subr.mxu0 0.0
        %1280 = vmatpush1.msra.mxu0 0.0
        %1281 = vmatprep.subr.mxu0 0.0
        %1282 = vmatpush1.msra.mxu0 0.0
        %1283 = vmatprep.subr.mxu0 0.0
        %1284 = vmatpush1.msra.mxu0 0.0
        %1285 = vmatprep.subr.mxu0 0.0
        %1286 = vmatpush1.msra.mxu0 0.0
        %1287 = vmatprep.subr.mxu0 0.0
        %1288 = vmatpush1.msra.mxu0 0.0
        %1289 = vmatprep.subr.mxu0 0.0
        %1290 = vmatpush1.msra.mxu0 0.0
        %1291 = vmatprep.subr.mxu0 0.0
        %1292 = vmatpush1.msra.mxu0 0.0
        %1293 = vmatprep.subr.mxu0 0.0
        %1294 = vmatpush1.msra.mxu0 0.0
        %1295 = vmatprep.subr.mxu0 0.0
        %1296 = vmatpush1.msra.mxu0 0.0
        %1297 = vmatprep.subr.mxu0 0.0
        %1298 = vmatpush1.msra.mxu0 0.0
        %1299 = vmatprep.mubr.f32.mxu0 0.0
        %1300 = vmatmul.mubr.f32.gmra.mrb[0].mxu0 %v1233
        %v1301 = vpop.f32.mrb[0].mxu0
        %v1302 = vadd.f32 %v525, %v1301
        %v1303 = vpop.f32.mrb[0].mxu0
        %1304 = vdwg.mxu0
        %1305 = vst [vmem:[#allocation2 + $0x18] sm:$0xff] %v1302
        %v1306 = vld [vmem:[%s3] sm:$0xff]
        %v1307 = vld [vmem:[%s3 + $0x8] sm:$0xff]
        %v1308 = vld [vmem:[%s3 + $0x10] sm:$0xff]
        %v1309 = vld [vmem:[%s3 + $0x18] sm:$0xff]
        %v1310 = vld [vmem:[#allocation2] sm:$0xff]
        %v1311 = vld [vmem:[#allocation2 + $0x8] sm:$0xff]
        %v1312 = vld [vmem:[#allocation2 + $0x10] sm:$0xff]
        %v1313 = vld [vmem:[#allocation2 + $0x18] sm:$0xff]
        %v1314 = vld [vmem:[%s4] sm:$0xff]
        %v1315 = vld [vmem:[%s4 + $0x8] sm:$0xff]
        %v1316 = vld [vmem:[%s4 + $0x10] sm:$0xff]
        %v1317 = vld [vmem:[%s4 + $0x18] sm:$0xff]
        %1319 = vset.pattern.permute.xlu0 0
        %1320 = vperm.xlu0 %1319, %v1314
        %v1321 = vpop.permute.xlu0 %1320
        %1324 = vset.pattern.permute.xlu0 0
        %1325 = vperm.xlu0 %1324, %v1315
        %v1326 = vpop.permute.xlu0 %1325
        %1329 = vset.pattern.permute.xlu0 0
        %1330 = vperm.xlu0 %1329, %v1316
        %v1331 = vpop.permute.xlu0 %1330
        %1334 = vset.pattern.permute.xlu0 0
        %1335 = vperm.xlu0 %1334, %v1317
        %v1336 = vpop.permute.xlu0 %1335
        %v1339 = vsel %vm379, %v1306, 0
        %v1342 = vsel %vm379, %v1307, 0
        %v1345 = vsel %vm379, %v1308, 0
        %v1348 = vsel %vm379, %v1309, 0
        %1350 = vmatprep.subr.mxu0 0.0
        %1351 = vmatpush1.msra.mxu0 %v1310
        %1352 = vmatprep.subr.mxu0 0.0
        %1353 = vmatpush1.msra.mxu0 %v1311
        %1354 = vmatprep.subr.mxu0 0.0
        %1355 = vmatpush1.msra.mxu0 %v1312
        %1356 = vmatprep.subr.mxu0 0.0
        %1357 = vmatpush1.msra.mxu0 %v1313
        %1358 = vmatprep.subr.mxu0 0.0
        %1359 = vmatpush1.msra.mxu0 0.0
        %1360 = vmatprep.subr.mxu0 0.0
        %1361 = vmatpush1.msra.mxu0 0.0
        %1362 = vmatprep.subr.mxu0 0.0
        %1363 = vmatpush1.msra.mxu0 0.0
        %1364 = vmatprep.subr.mxu0 0.0
        %1365 = vmatpush1.msra.mxu0 0.0
        %1366 = vmatprep.subr.mxu0 0.0
        %1367 = vmatpush1.msra.mxu0 0.0
        %1368 = vmatprep.subr.mxu0 0.0
        %1369 = vmatpush1.msra.mxu0 0.0
        %1370 = vmatprep.subr.mxu0 0.0
        %1371 = vmatpush1.msra.mxu0 0.0
        %1372 = vmatprep.subr.mxu0 0.0
        %1373 = vmatpush1.msra.mxu0 0.0
        %1374 = vmatprep.subr.mxu0 0.0
        %1375 = vmatpush1.msra.mxu0 0.0
        %1376 = vmatprep.subr.mxu0 0.0
        %1377 = vmatpush1.msra.mxu0 0.0
        %1378 = vmatprep.subr.mxu0 0.0
        %1379 = vmatpush1.msra.mxu0 0.0
        %1380 = vmatprep.subr.mxu0 0.0
        %1381 = vmatpush1.msra.mxu0 0.0
        %1382 = vmatprep.subr.mxu0 0.0
        %1383 = vmatpush1.msra.mxu0 0.0
        %1384 = vmatprep.subr.mxu0 0.0
        %1385 = vmatpush1.msra.mxu0 0.0
        %1386 = vmatprep.subr.mxu0 0.0
        %1387 = vmatpush1.msra.mxu0 0.0
        %1388 = vmatprep.subr.mxu0 0.0
        %1389 = vmatpush1.msra.mxu0 0.0
        %1390 = vmatprep.subr.mxu0 0.0
        %1391 = vmatpush1.msra.mxu0 0.0
        %1392 = vmatprep.subr.mxu0 0.0
        %1393 = vmatpush1.msra.mxu0 0.0
        %1394 = vmatprep.subr.mxu0 0.0
        %1395 = vmatpush1.msra.mxu0 0.0
        %1396 = vmatprep.subr.mxu0 0.0
        %1397 = vmatpush1.msra.mxu0 0.0
        %1398 = vmatprep.subr.mxu0 0.0
        %1399 = vmatpush1.msra.mxu0 0.0
        %1400 = vmatprep.subr.mxu0 0.0
        %1401 = vmatpush1.msra.mxu0 0.0
        %1402 = vmatprep.subr.mxu0 0.0
        %1403 = vmatpush1.msra.mxu0 0.0
        %1404 = vmatprep.subr.mxu0 0.0
        %1405 = vmatpush1.msra.mxu0 0.0
        %1406 = vmatprep.subr.mxu0 0.0
        %1407 = vmatpush1.msra.mxu0 0.0
        %1408 = vmatprep.subr.mxu0 0.0
        %1409 = vmatpush1.msra.mxu0 0.0
        %1410 = vmatprep.subr.mxu0 0.0
        %1411 = vmatpush1.msra.mxu0 0.0
        %1412 = vmatprep.subr.mxu0 0.0
        %1413 = vmatpush1.msra.mxu0 0.0
        %1414 = vmatprep.mubr.f32.mxu0 0.0
        %1415 = vmatmul.mubr.f32.gmra.mrb[0].mxu0 %v1339
        %v1416 = vpop.f32.mrb[0].mxu0
        %v1417 = vadd.f32 %v1321, %v1416
        %v1418 = vpop.f32.mrb[0].mxu0
        %1419 = vmatprep.mubr.f32.mxu0 0.0
        %1420 = vmatmul.mubr.f32.gmra.mrb[0].mxu0 %v1342
        %v1421 = vpop.f32.mrb[0].mxu0
        %v1422 = vadd.f32 %v1326, %v1421
        %v1423 = vpop.f32.mrb[0].mxu0
        %1424 = vmatprep.mubr.f32.mxu0 0.0
        %1425 = vmatmul.mubr.f32.gmra.mrb[0].mxu0 %v1345
        %v1426 = vpop.f32.mrb[0].mxu0
        %v1427 = vadd.f32 %v1331, %v1426
        %v1428 = vpop.f32.mrb[0].mxu0
        %1429 = vmatprep.mubr.f32.mxu0 0.0
        %1430 = vmatmul.mubr.f32.gmra.mrb[0].mxu0 %v1348
        %v1431 = vpop.f32.mrb[0].mxu0
        %v1432 = vadd.f32 %v1336, %v1431
        %v1433 = vpop.f32.mrb[0].mxu0
        %1434 = vdwg.mxu0
        %v1435 = vmax.f32 %v1417, 0.0
        %v1436 = vmax.f32 %v1422, 0.0
        %v1437 = vmax.f32 %v1427, 0.0
        %v1438 = vmax.f32 %v1432, 0.0
        %v1439 = vld [vmem:[%s6] sm:$0xff]
        %v1440 = vld [vmem:[%s6 + $0x8] sm:$0xff]
        %v1441 = vld [vmem:[%s6 + $0x10] sm:$0xff]
        %v1442 = vld [vmem:[%s6 + $0x18] sm:$0xff]
        %v1443 = vmul.f32 %v1435, %v1439
        %v1444 = vmul.f32 %v1436, %v1440
        %v1445 = vmul.f32 %v1437, %v1441
        %v1446 = vmul.f32 %v1438, %v1442
        %v1447 = vld [vmem:[#allocation3] sm:$0xff]
        %v1448 = vld [vmem:[#allocation3 + $0x8] sm:$0xff]
        %v1449 = vld [vmem:[#allocation3 + $0x10] sm:$0xff]
        %v1450 = vld [vmem:[#allocation3 + $0x18] sm:$0xff]
        %v1451 = vadd.f32 %v1443, %v1447
        %v1452 = vadd.f32 %v1444, %v1448
        %v1453 = vadd.f32 %v1445, %v1449
        %v1454 = vadd.f32 %v1446, %v1450
        %1455 = vst [vmem:[%s313] sm:$0xff] %v1451
        %1456 = vst [vmem:[%s313 + $0x8] sm:$0xff] %v1452
        %1457 = vst [vmem:[%s313 + $0x10] sm:$0xff] %v1453
        %1458 = vst [vmem:[%s313 + $0x18] sm:$0xff] %v1454
        %s1459 = sand.u32 %s204, 1
        %s1460 = scalar_lea.sflag [#allocation5], %s1459
        %s1461 = sand.u32 %s204, 1
        %s1462 = smul.addr %s1461, 32
        %s1463 = scalar_lea.vmem [#allocation6], %s1462
        // Predicated region
        $region57: #{tpu_custom_call.1} parent=51 // pred_check
          %p1464 = pneg %p214
        $region58: #{tpu_custom_call.1} parent=51 // pred_check_branch
          %1466 = sbr.rel (%p1464) target = $region60
        $region59: #{tpu_custom_call.1} parent=51 // pred_region
          %s1468 = ssub.s32 512, 512
          %1469 = vsyncadd %s1460, %s1468
          %s1470 = smul.addr %s23, 4
          %s1471 = smul.addr %s1470, 128
          %s1472 = scalar_lea.hbm %s8, %s1471
          %s1473 = sshll.u32 %s1463, 4
          %s1474 = int_to_ptr.vmem [resolvable:$true] %s1473
          %1479 = dma.vmem_to_hbm [thread:$0]  %s1474, 512, %s1472, %s1460, 128, 128, 8
        $region60: #{tpu_custom_call.1} parent=51 // pred_fallthru
          _
      $region52: #{tpu_custom_call.1} parent=5 // pred_fallthru
        _
      %p1480 = scmp.le.s32.totalorder 2, %s18
      // Predicated region
      $region61: #{tpu_custom_call.1} parent=5 // pred_check
        %p1481 = pneg %p1480
      $region62: #{tpu_custom_call.1} parent=5 // pred_check_branch
        %1483 = sbr.rel (%p1481) target = $region64
      $region63: #{tpu_custom_call.1} parent=5 // pred_region
        %s1484 = ssub.s32 %s18, 2
        // Predicated region
        $region65: #{tpu_custom_call.1} parent=63 // pred_check
          %p1485 = pneg %p220
        $region66: #{tpu_custom_call.1} parent=63 // pred_check_branch
          %1487 = sbr.rel (%p1485) target = $region68
        $region67: #{tpu_custom_call.1} parent=63 // pred_region
          %s1488 = sand.u32 %s205, 1
          %s1489 = scalar_lea.sflag [#allocation5], %s1488
          %s1490 = sand.u32 %s205, 1
          %s1491 = smul.addr %s1490, 32
          %s1492 = scalar_lea.vmem [#allocation6], %s1491
          %1493 = dma.done %s1489, 512
        $region68: #{tpu_custom_call.1} parent=63 // pred_fallthru
          _
      $region64: #{tpu_custom_call.1} parent=5 // pred_fallthru
        _
    $region6: #{tpu_custom_call.1} parent=1 // loop_footer
      %s22 = sadd.s32 1, %s18
    $region7: #{tpu_custom_call.1} parent=1 // loop_footer_branch
      %17 = sbr.rel target = $region3
    $region8: #{tpu_custom_call.1} parent=1 // loop_exit
      _
    %1494 = vsyncpa [#allocation4], 1
    %s1495 = scalar_lea.sflag [#allocation4], 1
    %1496 = vsyncpa %s1495, 1
    %1497 = vsyncpa [#allocation5], 1
    %s1498 = scalar_lea.sflag [#allocation5], 1
    %1499 = vsyncpa %s1498, 1

</llo_original>
